<compile_context>
chip_gen: v5e
topology: v5e:2x2
jax: 0.10.0
libtpu: 0.0.40
codegen_flags: <defaults>
</compile_context>

<pallas_src>
import functools

import jax
import jax.numpy as jnp
from jax.experimental import pallas as pl
from jax.experimental.pallas import tpu as pltpu


def _round_up(x, m):
    return ((x + m - 1) // m) * m


# ----------------------------------------------------------------------------
# Fused kernel: one GRU time step per grid iteration (all layers + o2o + logsoftmax)
# ----------------------------------------------------------------------------
def _gru_step_kernel(x_ref, h0_ref, w_ref, b_ref, o2o_w_ref, o2o_b_ref,
                     out_ref, hfin_ref, h_scratch):
    """Grid: (T,) over time, strictly sequential ("arbitrary").

    Blocks (all padded / lane-dense):
      x_ref     : (1, BP, HP)      this step's input, zero-padded to HP lanes
      h0_ref    : (L, BP, HP)      initial hidden (read only at t == 0)
      w_ref     : (L, 2*HP, 4*HP)  fused [x|h] -> [r | z | n_ih | n_hh] weights
      b_ref     : (L, 1, 4*HP)     fused biases [b_r | b_z | b_in | b_hn] (f32)
      o2o_w_ref : (HP, OP)
      o2o_b_ref : (1, OP)          pad lanes are -1e30 so they vanish in softmax
      out_ref   : (1, BP, OP)      per-step log-probs
      hfin_ref  : (L, BP, HP)      hidden after the last step (aliased with h0)
      h_scratch : (L, BP, HP)      VMEM-resident recurrent carry (persists over grid)
    """
    t = pl.program_id(0)
    num_layers = h_scratch.shape[0]
    hp = h_scratch.shape[-1]
    mm_dtype = w_ref.dtype           # f32 or bf16 (matmul operands only)
    f32 = jnp.float32

    @pl.when(t == 0)
    def _():
        h_scratch[...] = h0_ref[...]

    layer_in = x_ref[0]                                        # (BP, HP) f32

    # Python-unrolled layer loop (L is static); everything stays in vregs/VMEM.
    for layer in range(num_layers):
        h_prev = h_scratch[layer]                              # (BP, HP) f32
        w = w_ref[layer]                                       # (2HP, 4HP)
        b = b_ref[layer]                                       # (1, 4HP) f32
        xin = jnp.concatenate([layer_in, h_prev], axis=1)      # (BP, 2HP)
        # One MXU matmul per layer: columns are [r | z | n_ih | n_hh].
        a = jnp.dot(xin.astype(mm_dtype), w,
                    preferred_element_type=f32) + b            # (BP, 4HP) f32
        rz = jax.nn.sigmoid(a[:, :2 * hp])                     # 128-aligned slices
        r, z = rz[:, :hp], rz[:, hp:]
        # PyTorch GRU: n = tanh(W_in x + b_in + r * (W_hn h + b_hn))
        n = jnp.tanh(a[:, 2 * hp:3 * hp] + r * a[:, 3 * hp:])
        h_new = n + z * (h_prev - n)                           # == (1-z)*n + z*h
        h_scratch[layer] = h_new
        layer_in = h_new                                       # dropout == 0.0

    # o2o Linear + LogSoftmax(dim=1); padded logit lanes carry -1e30 bias (exp -> 0).
    logits = jnp.dot(layer_in.astype(mm_dtype), o2o_w_ref[...],
                     preferred_element_type=f32) + o2o_b_ref[...]
    m = jnp.max(logits, axis=1, keepdims=True)
    lse = m + jnp.log(jnp.sum(jnp.exp(logits - m), axis=1, keepdims=True))
    out_ref[0] = logits - lse

    # Constant-index output block: written back to HBM once at the end of the grid.
    hfin_ref[...] = h_scratch[...]


# ----------------------------------------------------------------------------
# Parameter construction / one-time padding + fusion
# ----------------------------------------------------------------------------
def init_params(key, input_size, hidden_size, output_size, num_layers):
    """PyTorch-style uniform(-1/sqrt(H), 1/sqrt(H)) init, weights stored (in, out)."""
    k = 1.0 / jnp.sqrt(jnp.float32(hidden_size))
    params = {"gru": []}
    for layer in range(num_layers):
        d_in = input_size if layer == 0 else hidden_size
        key, k1, k2, k3, k4 = jax.random.split(key, 5)
        params["gru"].append({
            "w_ih": jax.random.uniform(k1, (d_in, 3 * hidden_size), jnp.float32, -k, k),
            "w_hh": jax.random.uniform(k2, (hidden_size, 3 * hidden_size), jnp.float32, -k, k),
            "b_ih": jax.random.uniform(k3, (1, 3 * hidden_size), jnp.float32, -k, k),
            "b_hh": jax.random.uniform(k4, (1, 3 * hidden_size), jnp.float32, -k, k),
        })
    key, k5, k6 = jax.random.split(key, 3)
    params["o2o_w"] = jax.random.uniform(k5, (hidden_size, output_size), jnp.float32, -k, k)
    params["o2o_b"] = jax.random.uniform(k6, (1, output_size), jnp.float32, -k, k)
    return params


def prepare_fused_params(params, matmul_dtype=jnp.float32):
    """One-time padding + fusion (outside the step loop).

    Per layer, builds a single (2*HP, 4*HP) weight so each GRU layer is ONE matmul
    of concat([x, h]) against column blocks [r | z | n_ih | n_hh], lane-padded to
    multiples of 128, with the r/z biases pre-combined. o2o pad bias = -1e30 so
    padded logits vanish in log-softmax. Weights may be cast to bf16 (single-pass
    MXU); biases and element-wise math stay f32.
    """
    gru = params["gru"]
    H = gru[0]["w_hh"].shape[0]
    O = params["o2o_w"].shape[1]
    HP = _round_up(H, 128)
    OP = _round_up(O, 128)
    w_l, b_l = [], []
    for p in gru:
        d_in = p["w_ih"].shape[0]
        assert d_in <= HP, "input_size > padded hidden size not supported"
        w_ih, w_hh = p["w_ih"], p["w_hh"]                       # gates [r|z|n]
        w = jnp.zeros((2 * HP, 4 * HP), jnp.float32)
        w = w.at[:d_in, 0:H].set(w_ih[:, 0:H])                  # r (x part)
        w = w.at[HP:HP + H, 0:H].set(w_hh[:, 0:H])              # r (h part)
        w = w.at[:d_in, HP:HP + H].set(w_ih[:, H:2 * H])        # z (x part)
        w = w.at[HP:HP + H, HP:HP + H].set(w_hh[:, H:2 * H])    # z (h part)
        w = w.at[:d_in, 2 * HP:2 * HP + H].set(w_ih[:, 2 * H:])       # n_ih
        w = w.at[HP:HP + H, 3 * HP:3 * HP + H].set(w_hh[:, 2 * H:])   # n_hh
        w_l.append(w)
        b = jnp.zeros((1, 4 * HP), jnp.float32)
        b = b.at[:, 0:H].set(p["b_ih"][:, 0:H] + p["b_hh"][:, 0:H])
        b = b.at[:, HP:HP + H].set(p["b_ih"][:, H:2 * H] + p["b_hh"][:, H:2 * H])
        b = b.at[:, 2 * HP:2 * HP + H].set(p["b_ih"][:, 2 * H:])
        b = b.at[:, 3 * HP:3 * HP + H].set(p["b_hh"][:, 2 * H:])
        b_l.append(b)
    o2o_w = jnp.zeros((HP, OP), jnp.float32).at[:H, :O].set(params["o2o_w"])
    o2o_b = jnp.full((1, OP), -1e30, jnp.float32).at[:, :O].set(params["o2o_b"])
    return {
        "w": jnp.stack(w_l).astype(matmul_dtype),    # (L, 2HP, 4HP)
        "b": jnp.stack(b_l),                         # (L, 1, 4HP) f32
        "o2o_w": o2o_w.astype(matmul_dtype),         # (HP, OP)
        "o2o_b": o2o_b,                              # (1, OP) f32
    }


# ----------------------------------------------------------------------------
# pallas_call wrappers
# ----------------------------------------------------------------------------
@jax.jit
def _rnn_seq_padded(fused, xs_pad, hidden_pad):
    """xs_pad: (T, BP, HP); hidden_pad: (L, BP, HP). All shapes 8/128-aligned."""
    T, BP, HP = xs_pad.shape
    L = hidden_pad.shape[0]
    OP = fused["o2o_w"].shape[1]

    out_shapes = (
        jax.ShapeDtypeStruct((T, BP, OP), jnp.float32),
        jax.ShapeDtypeStruct((L, BP, HP), jnp.float32),
    )
    return pl.pallas_call(
        _gru_step_kernel,
        grid=(T,),
        in_specs=[
            pl.BlockSpec((1, BP, HP), lambda t: (t, 0, 0)),            # x (streamed)
            pl.BlockSpec((L, BP, HP), lambda t: (0, 0, 0)),            # h0 (resident)
            pl.BlockSpec(fused["w"].shape, lambda t: (0, 0, 0)),       # GRU weights
            pl.BlockSpec(fused["b"].shape, lambda t: (0, 0, 0)),       # GRU biases
            pl.BlockSpec(fused["o2o_w"].shape, lambda t: (0, 0)),      # o2o weight
            pl.BlockSpec(fused["o2o_b"].shape, lambda t: (0, 0)),      # o2o bias
        ],
        out_specs=(
            pl.BlockSpec((1, BP, OP), lambda t: (t, 0, 0)),            # log-probs
            pl.BlockSpec((L, BP, HP), lambda t: (0, 0, 0)),            # final hidden
        ),
        out_shape=out_shapes,
        scratch_shapes=[pltpu.VMEM((L, BP, HP), jnp.float32)],         # hidden carry
        input_output_aliases={1: 1},       # hidden in-place with new hidden
        compiler_params=pltpu.CompilerParams(
            dimension_semantics=("arbitrary",)),                        # sequential T
    )(xs_pad, hidden_pad, fused["w"], fused["b"], fused["o2o_w"], fused["o2o_b"])


def pretrained_rnn_forward_seq(fused, xs, hidden, output_size):
    """Run T time steps inside one pallas_call.

    xs: (T, B, input_size), hidden: (L, B, H)
    returns (log_probs (T, B, output_size), final hidden (L, B, H))
    """
    T, B, D = xs.shape
    L, _, H = hidden.shape
    HP = fused["w"].shape[1] // 2
    BP = _round_up(B, 8)
    xs_pad = jnp.zeros((T, BP, HP), jnp.float32).at[:, :B, :D].set(
        xs.astype(jnp.float32))
    h_pad = jnp.zeros((L, BP, HP), jnp.float32).at[:, :B, :H].set(
        hidden.astype(jnp.float32))
    out_pad, hfin_pad = _rnn_seq_padded(fused, xs_pad, h_pad)
    return out_pad[:, :B, :output_size], hfin_pad[:, :B, :H]


def pretrained_rnn_forward(fused, x, hidden, output_size):
    """Single step, matching PretrainedRNN.forward (T == 1)."""
    out_seq, new_hidden = pretrained_rnn_forward_seq(fused, x[None], hidden, output_size)
    return out_seq[0], new_hidden


def init_hidden(num_layers, batch_size, hidden_size):
    return jnp.zeros((num_layers, batch_size, hidden_size), jnp.float32)


# ----------------------------------------------------------------------------
# Pure-JAX reference for correctness check
# ----------------------------------------------------------------------------
def _reference_forward(params, x, hidden):
    num_layers = hidden.shape[0]
    H = hidden.shape[-1]
    layer_in = x
    new_hidden = []
    for layer in range(num_layers):
        p = params["gru"][layer]
        gi = layer_in @ p["w_ih"] + p["b_ih"]
        gh = hidden[layer] @ p["w_hh"] + p["b_hh"]
        r = jax.nn.sigmoid(gi[:, :H] + gh[:, :H])
        z = jax.nn.sigmoid(gi[:, H:2 * H] + gh[:, H:2 * H])
        n = jnp.tanh(gi[:, 2 * H:] + r * gh[:, 2 * H:])
        h_new = (1.0 - z) * n + z * hidden[layer]
        new_hidden.append(h_new)
        layer_in = h_new
    logits = layer_in @ params["o2o_w"] + params["o2o_b"]
    return jax.nn.log_softmax(logits, axis=1), jnp.stack(new_hidden, 0)


if __name__ == "__main__":
    batch = 2
    input_size = 16
    hidden_size = 32
    output_size = 20
    num_layers = 4
    seq_len = 6

    key = jax.random.PRNGKey(0)
    key, pkey, xkey, hkey, skey = jax.random.split(key, 5)

    params = init_params(pkey, input_size, hidden_size, output_size, num_layers)
    x = jax.random.normal(xkey, (batch, input_size), jnp.float32)
    hidden = jax.random.normal(hkey, (num_layers, batch, hidden_size), jnp.float32)
    xs = jax.random.normal(skey, (seq_len, batch, input_size), jnp.float32)

    # --- float32 matmul path: single step vs reference ----------------------
    fused_f32 = prepare_fused_params(params, matmul_dtype=jnp.float32)
    out, new_hidden = pretrained_rnn_forward(fused_f32, x, hidden, output_size)
    out, new_hidden = jax.block_until_ready((out, new_hidden))

    ref_out, ref_hidden = _reference_forward(params, x, hidden)
    assert out.shape == (batch, output_size)
    assert new_hidden.shape == (num_layers, batch, hidden_size)
    assert jnp.allclose(out, ref_out, atol=3e-5, rtol=3e-5)
    assert jnp.allclose(new_hidden, ref_hidden, atol=3e-5, rtol=3e-5)
    assert jnp.allclose(jnp.sum(jnp.exp(out), axis=1), 1.0, atol=1e-5)

    # --- sequence decode: all T steps inside ONE pallas_call ----------------
    outs, hfin = pretrained_rnn_forward_seq(fused_f32, xs, hidden, output_size)
    outs, hfin = jax.block_until_ready((outs, hfin))
    ref_outs, h_carry = [], hidden
    for t in range(seq_len):
        o_t, h_carry = _reference_forward(params, xs[t], h_carry)
        ref_outs.append(o_t)
    ref_outs = jnp.stack(ref_outs)
    assert outs.shape == (seq_len, batch, output_size)
    assert hfin.shape == (num_layers, batch, hidden_size)
    assert jnp.allclose(outs, ref_outs, atol=1e-4, rtol=1e-4)
    assert jnp.allclose(hfin, h_carry, atol=1e-4, rtol=1e-4)

    # --- bf16 MXU operands (v6e/v7x fast path), f32 element-wise math -------
    fused_bf16 = prepare_fused_params(params, matmul_dtype=jnp.bfloat16)
    out_bf, hid_bf = pretrained_rnn_forward(fused_bf16, x, hidden, output_size)
    out_bf, hid_bf = jax.block_until_ready((out_bf, hid_bf))
    assert jnp.allclose(out_bf, ref_out, atol=5e-2, rtol=5e-2)
    assert jnp.allclose(hid_bf, ref_hidden, atol=5e-2, rtol=5e-2)

    print("KERNEL_OK")
</pallas_src>

<mosaic_0001>
module attributes {stable_mosaic.version = 11 : i64} {
  func.func @_gru_step_kernel(%arg0: i32, %arg1: memref<1x8x128xf32, #tpu.memory_space<vmem>>, %arg2: memref<4x8x128xf32, #tpu.memory_space<vmem>>, %arg3: memref<4x256x512xf32, #tpu.memory_space<vmem>>, %arg4: memref<4x1x512xf32, #tpu.memory_space<vmem>>, %arg5: memref<128x128xf32, #tpu.memory_space<vmem>>, %arg6: memref<1x128xf32, #tpu.memory_space<vmem>>, %arg7: memref<1x8x128xf32, #tpu.memory_space<vmem>>, %arg8: memref<4x8x128xf32, #tpu.memory_space<vmem>>, %arg9: memref<4x8x128xf32, #tpu.memory_space<vmem>>) attributes {dimension_semantics = [#tpu.dimension_semantics<arbitrary>], iteration_bounds = array<i64: 1>, scalar_prefetch = 0 : i64, scratch_operands = 1 : i64, tpu.core_type = #tpu.core_type<tc>, window_params = [{transform_indices = @transform_0, window_bounds = array<i64: 1, 8, 128>}, {pipeline_mode = #tpu.pipeline_mode<synchronous>, transform_indices = @transform_1, window_bounds = array<i64: 4, 8, 128>}, {pipeline_mode = #tpu.pipeline_mode<synchronous>, transform_indices = @transform_2, window_bounds = array<i64: 4, 256, 512>}, {pipeline_mode = #tpu.pipeline_mode<synchronous>, transform_indices = @transform_3, window_bounds = array<i64: 4, 1, 512>}, {pipeline_mode = #tpu.pipeline_mode<synchronous>, transform_indices = @transform_4, window_bounds = array<i64: 128, 128>}, {pipeline_mode = #tpu.pipeline_mode<synchronous>, transform_indices = @transform_5, window_bounds = array<i64: 1, 128>}, {transform_indices = @transform_6, window_bounds = array<i64: 1, 8, 128>}, {pipeline_mode = #tpu.pipeline_mode<synchronous>, transform_indices = @transform_7, window_bounds = array<i64: 4, 8, 128>}]} {
    %c0_i32 = arith.constant 0 : i32
    %0 = arith.cmpi eq, %arg0, %c0_i32 : i32
    %1 = arith.extui %0 : i1 to i32
    %c0_i32_0 = arith.constant 0 : i32
    %2 = arith.cmpi ne, %1, %c0_i32_0 : i32
    scf.if %2 {
      %c0_71 = arith.constant 0 : index
      %c0_72 = arith.constant 0 : index
      %c0_73 = arith.constant 0 : index
      %142 = vector.load %arg2[%c0_71, %c0_72, %c0_73] : memref<4x8x128xf32, #tpu.memory_space<vmem>>, vector<4x8x128xf32>
      %c0_74 = arith.constant 0 : index
      %c0_75 = arith.constant 0 : index
      %c0_76 = arith.constant 0 : index
      %143 = vector.load %arg9[%c0_74, %c0_75, %c0_76] : memref<4x8x128xf32, #tpu.memory_space<vmem>>, vector<4x8x128xf32>
      tpu.vector_store %arg9[%c0_74, %c0_75, %c0_76], %142 {strides = array<i32>} : memref<4x8x128xf32, #tpu.memory_space<vmem>>, vector<4x8x128xf32>,
    } else {
    }
    %c0 = arith.constant 0 : index
    %c0_1 = arith.constant 0 : index
    %c0_2 = arith.constant 0 : index
    %3 = vector.load %arg1[%c0, %c0_1, %c0_2] : memref<1x8x128xf32, #tpu.memory_space<vmem>>, vector<1x8x128xf32>
    %4 = vector.shape_cast %3 : vector<1x8x128xf32> to vector<8x128xf32>
    %c0_3 = arith.constant 0 : index
    %c0_4 = arith.constant 0 : index
    %c0_5 = arith.constant 0 : index
    %5 = vector.load %arg9[%c0_3, %c0_4, %c0_5] : memref<4x8x128xf32, #tpu.memory_space<vmem>>, vector<1x8x128xf32>
    %6 = vector.shape_cast %5 : vector<1x8x128xf32> to vector<8x128xf32>
    %c0_6 = arith.constant 0 : index
    %c0_7 = arith.constant 0 : index
    %c0_8 = arith.constant 0 : index
    %7 = vector.load %arg3[%c0_6, %c0_7, %c0_8] : memref<4x256x512xf32, #tpu.memory_space<vmem>>, vector<1x256x512xf32>
    %8 = vector.shape_cast %7 : vector<1x256x512xf32> to vector<256x512xf32>
    %c0_9 = arith.constant 0 : index
    %c0_10 = arith.constant 0 : index
    %c0_11 = arith.constant 0 : index
    %9 = vector.load %arg4[%c0_9, %c0_10, %c0_11] : memref<4x1x512xf32, #tpu.memory_space<vmem>>, vector<1x1x512xf32>
    %10 = vector.shape_cast %9 : vector<1x1x512xf32> to vector<1x512xf32>
    %11 = tpu.concatenate %4, %6 in 1 : vector<8x128xf32>, vector<8x128xf32> -> vector<8x256xf32>
    %cst = arith.constant dense<0.000000e+00> : vector<8x512xf32>
    %12 = tpu.matmul %11, %8, %cst {dimension_numbers = #tpu.dot_dimension_numbers<[1], [0], [0], [1], [0, 0, 1, 1], [], []>} : vector<8x256xf32>, vector<256x512xf32>, vector<8x512xf32> -> vector<8x512xf32>
    %13 = vector.broadcast %10 : vector<1x512xf32> to vector<8x512xf32>
    %14 = arith.addf %12, %13 : vector<8x512xf32>
    %15 = vector.extract_strided_slice %14 {offsets = [0, 0], sizes = [8, 256], strides = [1, 1]} : vector<8x512xf32> to vector<8x256xf32>
    %16 = arith.negf %15 : vector<8x256xf32>
    %17 = math.exp %16 : vector<8x256xf32>
    %cst_12 = arith.constant 1.000000e+00 : f32
    %18 = vector.broadcast %cst_12 : f32 to vector<8x256xf32>
    %19 = arith.addf %18, %17 : vector<8x256xf32>
    %20 = arith.divf %18, %19 : vector<8x256xf32>
    %21 = vector.extract_strided_slice %20 {offsets = [0, 0], sizes = [8, 128], strides = [1, 1]} : vector<8x256xf32> to vector<8x128xf32>
    %22 = vector.extract_strided_slice %20 {offsets = [0, 128], sizes = [8, 128], strides = [1, 1]} : vector<8x256xf32> to vector<8x128xf32>
    %23 = vector.extract_strided_slice %14 {offsets = [0, 256], sizes = [8, 128], strides = [1, 1]} : vector<8x512xf32> to vector<8x128xf32>
    %24 = vector.extract_strided_slice %14 {offsets = [0, 384], sizes = [8, 128], strides = [1, 1]} : vector<8x512xf32> to vector<8x128xf32>
    %25 = arith.mulf %21, %24 : vector<8x128xf32>
    %26 = arith.addf %23, %25 : vector<8x128xf32>
    %27 = math.tanh %26 : vector<8x128xf32>
    %28 = arith.subf %6, %27 : vector<8x128xf32>
    %29 = arith.mulf %22, %28 : vector<8x128xf32>
    %30 = arith.addf %27, %29 : vector<8x128xf32>
    %c0_13 = arith.constant 0 : index
    %c0_14 = arith.constant 0 : index
    %c0_15 = arith.constant 0 : index
    %31 = vector.load %arg9[%c0_13, %c0_14, %c0_15] : memref<4x8x128xf32, #tpu.memory_space<vmem>>, vector<1x8x128xf32>
    %32 = vector.shape_cast %31 : vector<1x8x128xf32> to vector<8x128xf32>
    %33 = vector.shape_cast %30 : vector<8x128xf32> to vector<1x8x128xf32>
    tpu.vector_store %arg9[%c0_13, %c0_14, %c0_15], %33 {strides = array<i32>} : memref<4x8x128xf32, #tpu.memory_space<vmem>>, vector<1x8x128xf32>,
    %c1 = arith.constant 1 : index
    %c0_16 = arith.constant 0 : index
    %c0_17 = arith.constant 0 : index
    %34 = vector.load %arg9[%c1, %c0_16, %c0_17] : memref<4x8x128xf32, #tpu.memory_space<vmem>>, vector<1x8x128xf32>
    %35 = vector.shape_cast %34 : vector<1x8x128xf32> to vector<8x128xf32>
    %c1_18 = arith.constant 1 : index
    %c0_19 = arith.constant 0 : index
    %c0_20 = arith.constant 0 : index
    %36 = vector.load %arg3[%c1_18, %c0_19, %c0_20] : memref<4x256x512xf32, #tpu.memory_space<vmem>>, vector<1x256x512xf32>
    %37 = vector.shape_cast %36 : vector<1x256x512xf32> to vector<256x512xf32>
    %c1_21 = arith.constant 1 : index
    %c0_22 = arith.constant 0 : index
    %c0_23 = arith.constant 0 : index
    %38 = vector.load %arg4[%c1_21, %c0_22, %c0_23] : memref<4x1x512xf32, #tpu.memory_space<vmem>>, vector<1x1x512xf32>
    %39 = vector.shape_cast %38 : vector<1x1x512xf32> to vector<1x512xf32>
    %40 = tpu.concatenate %30, %35 in 1 : vector<8x128xf32>, vector<8x128xf32> -> vector<8x256xf32>
    %cst_24 = arith.constant dense<0.000000e+00> : vector<8x512xf32>
    %41 = tpu.matmul %40, %37, %cst_24 {dimension_numbers = #tpu.dot_dimension_numbers<[1], [0], [0], [1], [0, 0, 1, 1], [], []>} : vector<8x256xf32>, vector<256x512xf32>, vector<8x512xf32> -> vector<8x512xf32>
    %42 = vector.broadcast %39 : vector<1x512xf32> to vector<8x512xf32>
    %43 = arith.addf %41, %42 : vector<8x512xf32>
    %44 = vector.extract_strided_slice %43 {offsets = [0, 0], sizes = [8, 256], strides = [1, 1]} : vector<8x512xf32> to vector<8x256xf32>
    %45 = arith.negf %44 : vector<8x256xf32>
    %46 = math.exp %45 : vector<8x256xf32>
    %cst_25 = arith.constant 1.000000e+00 : f32
    %47 = vector.broadcast %cst_25 : f32 to vector<8x256xf32>
    %48 = arith.addf %47, %46 : vector<8x256xf32>
    %49 = arith.divf %47, %48 : vector<8x256xf32>
    %50 = vector.extract_strided_slice %49 {offsets = [0, 0], sizes = [8, 128], strides = [1, 1]} : vector<8x256xf32> to vector<8x128xf32>
    %51 = vector.extract_strided_slice %49 {offsets = [0, 128], sizes = [8, 128], strides = [1, 1]} : vector<8x256xf32> to vector<8x128xf32>
    %52 = vector.extract_strided_slice %43 {offsets = [0, 256], sizes = [8, 128], strides = [1, 1]} : vector<8x512xf32> to vector<8x128xf32>
    %53 = vector.extract_strided_slice %43 {offsets = [0, 384], sizes = [8, 128], strides = [1, 1]} : vector<8x512xf32> to vector<8x128xf32>
    %54 = arith.mulf %50, %53 : vector<8x128xf32>
    %55 = arith.addf %52, %54 : vector<8x128xf32>
    %56 = math.tanh %55 : vector<8x128xf32>
    %57 = arith.subf %35, %56 : vector<8x128xf32>
    %58 = arith.mulf %51, %57 : vector<8x128xf32>
    %59 = arith.addf %56, %58 : vector<8x128xf32>
    %c1_26 = arith.constant 1 : index
    %c0_27 = arith.constant 0 : index
    %c0_28 = arith.constant 0 : index
    %60 = vector.load %arg9[%c1_26, %c0_27, %c0_28] : memref<4x8x128xf32, #tpu.memory_space<vmem>>, vector<1x8x128xf32>
    %61 = vector.shape_cast %60 : vector<1x8x128xf32> to vector<8x128xf32>
    %62 = vector.shape_cast %59 : vector<8x128xf32> to vector<1x8x128xf32>
    tpu.vector_store %arg9[%c1_26, %c0_27, %c0_28], %62 {strides = array<i32>} : memref<4x8x128xf32, #tpu.memory_space<vmem>>, vector<1x8x128xf32>,
    %c2 = arith.constant 2 : index
    %c0_29 = arith.constant 0 : index
    %c0_30 = arith.constant 0 : index
    %63 = vector.load %arg9[%c2, %c0_29, %c0_30] : memref<4x8x128xf32, #tpu.memory_space<vmem>>, vector<1x8x128xf32>
    %64 = vector.shape_cast %63 : vector<1x8x128xf32> to vector<8x128xf32>
    %c2_31 = arith.constant 2 : index
    %c0_32 = arith.constant 0 : index
    %c0_33 = arith.constant 0 : index
    %65 = vector.load %arg3[%c2_31, %c0_32, %c0_33] : memref<4x256x512xf32, #tpu.memory_space<vmem>>, vector<1x256x512xf32>
    %66 = vector.shape_cast %65 : vector<1x256x512xf32> to vector<256x512xf32>
    %c2_34 = arith.constant 2 : index
    %c0_35 = arith.constant 0 : index
    %c0_36 = arith.constant 0 : index
    %67 = vector.load %arg4[%c2_34, %c0_35, %c0_36] : memref<4x1x512xf32, #tpu.memory_space<vmem>>, vector<1x1x512xf32>
    %68 = vector.shape_cast %67 : vector<1x1x512xf32> to vector<1x512xf32>
    %69 = tpu.concatenate %59, %64 in 1 : vector<8x128xf32>, vector<8x128xf32> -> vector<8x256xf32>
    %cst_37 = arith.constant dense<0.000000e+00> : vector<8x512xf32>
    %70 = tpu.matmul %69, %66, %cst_37 {dimension_numbers = #tpu.dot_dimension_numbers<[1], [0], [0], [1], [0, 0, 1, 1], [], []>} : vector<8x256xf32>, vector<256x512xf32>, vector<8x512xf32> -> vector<8x512xf32>
    %71 = vector.broadcast %68 : vector<1x512xf32> to vector<8x512xf32>
    %72 = arith.addf %70, %71 : vector<8x512xf32>
    %73 = vector.extract_strided_slice %72 {offsets = [0, 0], sizes = [8, 256], strides = [1, 1]} : vector<8x512xf32> to vector<8x256xf32>
    %74 = arith.negf %73 : vector<8x256xf32>
    %75 = math.exp %74 : vector<8x256xf32>
    %cst_38 = arith.constant 1.000000e+00 : f32
    %76 = vector.broadcast %cst_38 : f32 to vector<8x256xf32>
    %77 = arith.addf %76, %75 : vector<8x256xf32>
    %78 = arith.divf %76, %77 : vector<8x256xf32>
    %79 = vector.extract_strided_slice %78 {offsets = [0, 0], sizes = [8, 128], strides = [1, 1]} : vector<8x256xf32> to vector<8x128xf32>
    %80 = vector.extract_strided_slice %78 {offsets = [0, 128], sizes = [8, 128], strides = [1, 1]} : vector<8x256xf32> to vector<8x128xf32>
    %81 = vector.extract_strided_slice %72 {offsets = [0, 256], sizes = [8, 128], strides = [1, 1]} : vector<8x512xf32> to vector<8x128xf32>
    %82 = vector.extract_strided_slice %72 {offsets = [0, 384], sizes = [8, 128], strides = [1, 1]} : vector<8x512xf32> to vector<8x128xf32>
    %83 = arith.mulf %79, %82 : vector<8x128xf32>
    %84 = arith.addf %81, %83 : vector<8x128xf32>
    %85 = math.tanh %84 : vector<8x128xf32>
    %86 = arith.subf %64, %85 : vector<8x128xf32>
    %87 = arith.mulf %80, %86 : vector<8x128xf32>
    %88 = arith.addf %85, %87 : vector<8x128xf32>
    %c2_39 = arith.constant 2 : index
    %c0_40 = arith.constant 0 : index
    %c0_41 = arith.constant 0 : index
    %89 = vector.load %arg9[%c2_39, %c0_40, %c0_41] : memref<4x8x128xf32, #tpu.memory_space<vmem>>, vector<1x8x128xf32>
    %90 = vector.shape_cast %89 : vector<1x8x128xf32> to vector<8x128xf32>
    %91 = vector.shape_cast %88 : vector<8x128xf32> to vector<1x8x128xf32>
    tpu.vector_store %arg9[%c2_39, %c0_40, %c0_41], %91 {strides = array<i32>} : memref<4x8x128xf32, #tpu.memory_space<vmem>>, vector<1x8x128xf32>,
    %c3 = arith.constant 3 : index
    %c0_42 = arith.constant 0 : index
    %c0_43 = arith.constant 0 : index
    %92 = vector.load %arg9[%c3, %c0_42, %c0_43] : memref<4x8x128xf32, #tpu.memory_space<vmem>>, vector<1x8x128xf32>
    %93 = vector.shape_cast %92 : vector<1x8x128xf32> to vector<8x128xf32>
    %c3_44 = arith.constant 3 : index
    %c0_45 = arith.constant 0 : index
    %c0_46 = arith.constant 0 : index
    %94 = vector.load %arg3[%c3_44, %c0_45, %c0_46] : memref<4x256x512xf32, #tpu.memory_space<vmem>>, vector<1x256x512xf32>
    %95 = vector.shape_cast %94 : vector<1x256x512xf32> to vector<256x512xf32>
    %c3_47 = arith.constant 3 : index
    %c0_48 = arith.constant 0 : index
    %c0_49 = arith.constant 0 : index
    %96 = vector.load %arg4[%c3_47, %c0_48, %c0_49] : memref<4x1x512xf32, #tpu.memory_space<vmem>>, vector<1x1x512xf32>
    %97 = vector.shape_cast %96 : vector<1x1x512xf32> to vector<1x512xf32>
    %98 = tpu.concatenate %88, %93 in 1 : vector<8x128xf32>, vector<8x128xf32> -> vector<8x256xf32>
    %cst_50 = arith.constant dense<0.000000e+00> : vector<8x512xf32>
    %99 = tpu.matmul %98, %95, %cst_50 {dimension_numbers = #tpu.dot_dimension_numbers<[1], [0], [0], [1], [0, 0, 1, 1], [], []>} : vector<8x256xf32>, vector<256x512xf32>, vector<8x512xf32> -> vector<8x512xf32>
    %100 = vector.broadcast %97 : vector<1x512xf32> to vector<8x512xf32>
    %101 = arith.addf %99, %100 : vector<8x512xf32>
    %102 = vector.extract_strided_slice %101 {offsets = [0, 0], sizes = [8, 256], strides = [1, 1]} : vector<8x512xf32> to vector<8x256xf32>
    %103 = arith.negf %102 : vector<8x256xf32>
    %104 = math.exp %103 : vector<8x256xf32>
    %cst_51 = arith.constant 1.000000e+00 : f32
    %105 = vector.broadcast %cst_51 : f32 to vector<8x256xf32>
    %106 = arith.addf %105, %104 : vector<8x256xf32>
    %107 = arith.divf %105, %106 : vector<8x256xf32>
    %108 = vector.extract_strided_slice %107 {offsets = [0, 0], sizes = [8, 128], strides = [1, 1]} : vector<8x256xf32> to vector<8x128xf32>
    %109 = vector.extract_strided_slice %107 {offsets = [0, 128], sizes = [8, 128], strides = [1, 1]} : vector<8x256xf32> to vector<8x128xf32>
    %110 = vector.extract_strided_slice %101 {offsets = [0, 256], sizes = [8, 128], strides = [1, 1]} : vector<8x512xf32> to vector<8x128xf32>
    %111 = vector.extract_strided_slice %101 {offsets = [0, 384], sizes = [8, 128], strides = [1, 1]} : vector<8x512xf32> to vector<8x128xf32>
    %112 = arith.mulf %108, %111 : vector<8x128xf32>
    %113 = arith.addf %110, %112 : vector<8x128xf32>
    %114 = math.tanh %113 : vector<8x128xf32>
    %115 = arith.subf %93, %114 : vector<8x128xf32>
    %116 = arith.mulf %109, %115 : vector<8x128xf32>
    %117 = arith.addf %114, %116 : vector<8x128xf32>
    %c3_52 = arith.constant 3 : index
    %c0_53 = arith.constant 0 : index
    %c0_54 = arith.constant 0 : index
    %118 = vector.load %arg9[%c3_52, %c0_53, %c0_54] : memref<4x8x128xf32, #tpu.memory_space<vmem>>, vector<1x8x128xf32>
    %119 = vector.shape_cast %118 : vector<1x8x128xf32> to vector<8x128xf32>
    %120 = vector.shape_cast %117 : vector<8x128xf32> to vector<1x8x128xf32>
    tpu.vector_store %arg9[%c3_52, %c0_53, %c0_54], %120 {strides = array<i32>} : memref<4x8x128xf32, #tpu.memory_space<vmem>>, vector<1x8x128xf32>,
    %c0_55 = arith.constant 0 : index
    %c0_56 = arith.constant 0 : index
    %121 = vector.load %arg5[%c0_55, %c0_56] : memref<128x128xf32, #tpu.memory_space<vmem>>, vector<128x128xf32>
    %cst_57 = arith.constant dense<0.000000e+00> : vector<8x128xf32>
    %122 = tpu.matmul %117, %121, %cst_57 {dimension_numbers = #tpu.dot_dimension_numbers<[1], [0], [0], [1], [0, 0, 1, 1], [], []>} : vector<8x128xf32>, vector<128x128xf32>, vector<8x128xf32> -> vector<8x128xf32>
    %c0_58 = arith.constant 0 : index
    %c0_59 = arith.constant 0 : index
    %123 = vector.load %arg6[%c0_58, %c0_59] : memref<1x128xf32, #tpu.memory_space<vmem>>, vector<1x128xf32>
    %124 = vector.broadcast %123 : vector<1x128xf32> to vector<8x128xf32>
    %125 = arith.addf %122, %124 : vector<8x128xf32>
    %cst_60 = arith.constant dense<0xFF800000> : vector<8xf32>
    %126 = vector.multi_reduction <maximumf>, %125, %cst_60 [1] : vector<8x128xf32> to vector<8xf32>
    %127 = vector.shape_cast %126 : vector<8xf32> to vector<8x1xf32>
    %128 = vector.broadcast %127 : vector<8x1xf32> to vector<8x128xf32>
    %129 = arith.subf %125, %128 : vector<8x128xf32>
    %130 = math.exp %129 : vector<8x128xf32>
    %cst_61 = arith.constant dense<0.000000e+00> : vector<8xf32>
    %131 = vector.multi_reduction <add>, %130, %cst_61 [1] : vector<8x128xf32> to vector<8xf32>
    %132 = vector.shape_cast %131 : vector<8xf32> to vector<8x1xf32>
    %133 = math.log %132 : vector<8x1xf32>
    %134 = arith.addf %127, %133 : vector<8x1xf32>
    %135 = vector.broadcast %134 : vector<8x1xf32> to vector<8x128xf32>
    %136 = arith.subf %125, %135 : vector<8x128xf32>
    %c0_62 = arith.constant 0 : index
    %c0_63 = arith.constant 0 : index
    %c0_64 = arith.constant 0 : index
    %137 = vector.load %arg7[%c0_62, %c0_63, %c0_64] : memref<1x8x128xf32, #tpu.memory_space<vmem>>, vector<1x8x128xf32>
    %138 = vector.shape_cast %137 : vector<1x8x128xf32> to vector<8x128xf32>
    %139 = vector.shape_cast %136 : vector<8x128xf32> to vector<1x8x128xf32>
    tpu.vector_store %arg7[%c0_62, %c0_63, %c0_64], %139 {strides = array<i32>} : memref<1x8x128xf32, #tpu.memory_space<vmem>>, vector<1x8x128xf32>,
    %c0_65 = arith.constant 0 : index
    %c0_66 = arith.constant 0 : index
    %c0_67 = arith.constant 0 : index
    %140 = vector.load %arg9[%c0_65, %c0_66, %c0_67] : memref<4x8x128xf32, #tpu.memory_space<vmem>>, vector<4x8x128xf32>
    %c0_68 = arith.constant 0 : index
    %c0_69 = arith.constant 0 : index
    %c0_70 = arith.constant 0 : index
    %141 = vector.load %arg8[%c0_68, %c0_69, %c0_70] : memref<4x8x128xf32, #tpu.memory_space<vmem>>, vector<4x8x128xf32>
    tpu.vector_store %arg8[%c0_68, %c0_69, %c0_70], %140 {strides = array<i32>} : memref<4x8x128xf32, #tpu.memory_space<vmem>>, vector<4x8x128xf32>,
    return
  }
  func.func @transform_0(%arg0: i32) -> (i32, i32, i32) {
    %c0_i32 = arith.constant 0 : i32
    %c0_i32_0 = arith.constant 0 : i32
    %c0_i32_1 = arith.constant 0 : i32
    return %arg0, %c0_i32, %c0_i32_0 : i32, i32, i32
  }
  func.func @transform_1(%arg0: i32) -> (i32, i32, i32) {
    %c0_i32 = arith.constant 0 : i32
    %c0_i32_0 = arith.constant 0 : i32
    %c0_i32_1 = arith.constant 0 : i32
    %c0_i32_2 = arith.constant 0 : i32
    return %c0_i32, %c0_i32_0, %c0_i32_1 : i32, i32, i32
  }
  func.func @transform_2(%arg0: i32) -> (i32, i32, i32) {
    %c0_i32 = arith.constant 0 : i32
    %c0_i32_0 = arith.constant 0 : i32
    %c0_i32_1 = arith.constant 0 : i32
    %c0_i32_2 = arith.constant 0 : i32
    return %c0_i32, %c0_i32_0, %c0_i32_1 : i32, i32, i32
  }
  func.func @transform_3(%arg0: i32) -> (i32, i32, i32) {
    %c0_i32 = arith.constant 0 : i32
    %c0_i32_0 = arith.constant 0 : i32
    %c0_i32_1 = arith.constant 0 : i32
    %c0_i32_2 = arith.constant 0 : i32
    return %c0_i32, %c0_i32_0, %c0_i32_1 : i32, i32, i32
  }
  func.func @transform_4(%arg0: i32) -> (i32, i32) {
    %c0_i32 = arith.constant 0 : i32
    %c0_i32_0 = arith.constant 0 : i32
    %c0_i32_1 = arith.constant 0 : i32
    return %c0_i32, %c0_i32_0 : i32, i32
  }
  func.func @transform_5(%arg0: i32) -> (i32, i32) {
    %c0_i32 = arith.constant 0 : i32
    %c0_i32_0 = arith.constant 0 : i32
    %c0_i32_1 = arith.constant 0 : i32
    return %c0_i32, %c0_i32_0 : i32, i32
  }
  func.func @transform_6(%arg0: i32) -> (i32, i32, i32) {
    %c0_i32 = arith.constant 0 : i32
    %c0_i32_0 = arith.constant 0 : i32
    %c0_i32_1 = arith.constant 0 : i32
    return %arg0, %c0_i32, %c0_i32_0 : i32, i32, i32
  }
  func.func @transform_7(%arg0: i32) -> (i32, i32, i32) {
    %c0_i32 = arith.constant 0 : i32
    %c0_i32_0 = arith.constant 0 : i32
    %c0_i32_1 = arith.constant 0 : i32
    %c0_i32_2 = arith.constant 0 : i32
    return %c0_i32, %c0_i32_0, %c0_i32_1 : i32, i32, i32
  }
}

</mosaic_0001>

<llo_original>
// kernel: _rnn_seq_padded.1
$region0: #{_rnn_seq_padded.1}
  #allocation0 [shape = 'u32[]', space=smem, size = 0x4, offset = 0x4, fixed_abs, tag = 'smem constant byte address 0x4 - core index']
  #allocation1 [shape = 'u32[72,128]{1,0:T(1,128)}', space=vmem, size = 0x9000, scoped, tag = 'internal scratch']
  #allocation2 [shape = 'f32[4,8,128]{2,1,0:T(8,128)}', space=vmem, size = 0x4000, scoped, tag = 'scratch operand']
  %s0 = inlined_call_operand.hbm [shape: f32[1,8,128], index: 0, kind: input, shape index: {}]
  %s1 = inlined_call_operand.hbm [shape: f32[4,8,128], index: 1, kind: input, shape index: {}, may-alias: {1,7}]
  %s2 = inlined_call_operand.hbm [shape: f32[4,256,512], index: 2, kind: input, shape index: {}]
  %s3 = inlined_call_operand.hbm [shape: f32[4,1,512], index: 3, kind: input, shape index: {}]
  %s4 = inlined_call_operand.hbm [shape: f32[128,128], index: 4, kind: input, shape index: {}]
  %s5 = inlined_call_operand.hbm [shape: f32[1,128], index: 5, kind: input, shape index: {}]
  %s6 = inlined_call_operand.hbm [shape: f32[1,8,128], index: 6, kind: output, shape index: {0}]
  %s7 = inlined_call_operand.hbm [shape: f32[4,8,128], index: 7, kind: output, shape index: {1}, may-alias: {1,7}]
  %8 = xla_tuple %s6, %s7
  %s9 = sld [smem:[#allocation0]]
  $region70: #{_rnn_seq_padded.1} parent=0
    _
  %s11 = ssub.s32 1, %s9
  %s12 = scalar_select 0, %s11, %s9
  $region1: #{_rnn_seq_padded.1} parent=0
    #allocation3 [shape = 'u8[4096]{0}', space=vmem, size = 0x1000, scoped, tag = 'input window, operand 0, single buffered']
    #allocation4 [shape = 's32[1]{0}', space=sflag, size = 0x4, scoped, tag = 'scoped memory for _rnn_seq_padded.1']
    #allocation5 [shape = 's32[1]{0}', space=sflag, size = 0x4, scoped, tag = 'scoped memory for _rnn_seq_padded.1']
    #allocation6 [shape = 'u8[16384]{0}', space=vmem, size = 0x4000, scoped, tag = 'input window, operand 1, single buffered']
    #allocation7 [shape = 's32[1]{0}', space=sflag, size = 0x4, scoped, tag = 'scoped memory for _rnn_seq_padded.1']
    #allocation8 [shape = 'u8[2097152]{0}', space=vmem, size = 0x200000, scoped, tag = 'input window, operand 2, single buffered']
    #allocation9 [shape = 'u8[8192]{0}', space=vmem, size = 0x2000, scoped, tag = 'input window, operand 3, single buffered']
    #allocation10 [shape = 's32[1]{0}', space=sflag, size = 0x4, scoped, tag = 'scoped memory for _rnn_seq_padded.1']
    #allocation11 [shape = 'u8[65536]{0}', space=vmem, size = 0x10000, scoped, tag = 'input window, operand 4, single buffered']
    #allocation12 [shape = 'u8[512]{0}', space=vmem, size = 0x400, scoped, tag = 'input window, operand 5, single buffered']
    #allocation13 [shape = 's32[1]{0}', space=sflag, size = 0x4, scoped, tag = 'scoped memory for _rnn_seq_padded.1']
    #allocation14 [shape = 'u8[4096]{0}', space=vmem, size = 0x1000, scoped, tag = 'output window, operand 0, single buffered']
    #allocation15 [shape = 'u8[16384]{0}', space=vmem, size = 0x4000, scoped, tag = 'output window, operand 1, single buffered']
    #allocation16 [shape = 's32[1]{0}', space=sflag, size = 0x4, scoped, tag = 'scoped memory for _rnn_seq_padded.1']
    %13 = vsyncpa [#allocation4], 0
    %14 = vsyncpa [#allocation7], 0
    %15 = vsyncpa [#allocation10], 0
    %16 = vsyncpa [#allocation13], 0
    %17 = vsyncpa [#allocation5], 0
    %18 = vsyncpa [#allocation16], 0
    // Predicated region
    $region2: #{_rnn_seq_padded.1} parent=1 // pred_check
      _
    $region3: #{_rnn_seq_padded.1} parent=1 // pred_check_branch
      %20 = sbr.rel (0) target = $region5
    $region4: #{_rnn_seq_padded.1} parent=1 // pred_region
      %22 = vsyncadd [#allocation4], 0
      %s24 = sshll.u32 %s0, 4
      %s25 = int_to_ptr.hbm [resolvable:$true] %s24
      %s26 = sshll.u32 [#allocation3], 4
      %s27 = int_to_ptr.vmem [resolvable:$true] %s26
      %29 = dma.hbm_to_vmem [thread:$0]  %s25, 128, %s27, [#allocation4]
    $region5: #{_rnn_seq_padded.1} parent=1 // pred_fallthru
      _
    // Predicated region
    $region6: #{_rnn_seq_padded.1} parent=1 // pred_check
      _
    $region7: #{_rnn_seq_padded.1} parent=1 // pred_check_branch
      %31 = sbr.rel (0) target = $region9
    $region8: #{_rnn_seq_padded.1} parent=1 // pred_region
      %33 = vsyncadd [#allocation7], 0
      %s34 = sshll.u32 %s1, 4
      %s35 = int_to_ptr.hbm [resolvable:$true] %s34
      %s36 = sshll.u32 [#allocation6], 4
      %s37 = int_to_ptr.vmem [resolvable:$true] %s36
      %42 = dma.hbm_to_vmem [thread:$0]  %s35, 512, %s37, [#allocation7], 128, 128, 8
    $region9: #{_rnn_seq_padded.1} parent=1 // pred_fallthru
      _
    // Predicated region
    $region10: #{_rnn_seq_padded.1} parent=1 // pred_check
      _
    $region11: #{_rnn_seq_padded.1} parent=1 // pred_check_branch
      %44 = sbr.rel (0) target = $region13
    $region12: #{_rnn_seq_padded.1} parent=1 // pred_region
      %46 = vsyncadd [#allocation7], 0
      %s47 = sshll.u32 %s2, 4
      %s48 = int_to_ptr.hbm [resolvable:$true] %s47
      %s49 = sshll.u32 [#allocation8], 4
      %s50 = int_to_ptr.vmem [resolvable:$true] %s49
      %55 = dma.hbm_to_vmem [thread:$0]  %s48, 65536, %s50, [#allocation7], 512, 512, 32
    $region13: #{_rnn_seq_padded.1} parent=1 // pred_fallthru
      _
    // Predicated region
    $region14: #{_rnn_seq_padded.1} parent=1 // pred_check
      _
    $region15: #{_rnn_seq_padded.1} parent=1 // pred_check_branch
      %57 = sbr.rel (0) target = $region17
    $region16: #{_rnn_seq_padded.1} parent=1 // pred_region
      %59 = vsyncadd [#allocation10], 0
      %s60 = sshll.u32 %s3, 4
      %s61 = int_to_ptr.hbm [resolvable:$true] %s60
      %s62 = sshll.u32 [#allocation9], 4
      %s63 = int_to_ptr.vmem [resolvable:$true] %s62
      %68 = dma.hbm_to_vmem [thread:$0]  %s61, 256, %s63, [#allocation10], 64, 64, 4
    $region17: #{_rnn_seq_padded.1} parent=1 // pred_fallthru
      _
    // Predicated region
    $region18: #{_rnn_seq_padded.1} parent=1 // pred_check
      _
    $region19: #{_rnn_seq_padded.1} parent=1 // pred_check_branch
      %70 = sbr.rel (0) target = $region21
    $region20: #{_rnn_seq_padded.1} parent=1 // pred_region
      %72 = vsyncadd [#allocation10], 0
      %s73 = sshll.u32 %s4, 4
      %s74 = int_to_ptr.hbm [resolvable:$true] %s73
      %s75 = sshll.u32 [#allocation11], 4
      %s76 = int_to_ptr.vmem [resolvable:$true] %s75
      %81 = dma.hbm_to_vmem [thread:$0]  %s74, 2048, %s76, [#allocation10], 128, 128, 8
    $region21: #{_rnn_seq_padded.1} parent=1 // pred_fallthru
      _
    // Predicated region
    $region22: #{_rnn_seq_padded.1} parent=1 // pred_check
      _
    $region23: #{_rnn_seq_padded.1} parent=1 // pred_check_branch
      %83 = sbr.rel (0) target = $region25
    $region24: #{_rnn_seq_padded.1} parent=1 // pred_region
      %85 = vsyncadd [#allocation13], 0
      %s87 = sshll.u32 %s5, 4
      %s88 = int_to_ptr.hbm [resolvable:$true] %s87
      %s89 = sshll.u32 [#allocation12], 4
      %s90 = int_to_ptr.vmem [resolvable:$true] %s89
      %92 = dma.hbm_to_vmem [thread:$0]  %s88, 16, %s90, [#allocation13]
    $region25: #{_rnn_seq_padded.1} parent=1 // pred_fallthru
      _
    // Predicated region
    $region26: #{_rnn_seq_padded.1} parent=1 // pred_check
      _
    $region27: #{_rnn_seq_padded.1} parent=1 // pred_check_branch
      %94 = sbr.rel (0) target = $region29
    $region28: #{_rnn_seq_padded.1} parent=1 // pred_region
      %96 = dma.done [#allocation4], 128
    $region29: #{_rnn_seq_padded.1} parent=1 // pred_fallthru
      _
    // Predicated region
    $region30: #{_rnn_seq_padded.1} parent=1 // pred_check
      _
    $region31: #{_rnn_seq_padded.1} parent=1 // pred_check_branch
      %98 = sbr.rel (0) target = $region33
    $region32: #{_rnn_seq_padded.1} parent=1 // pred_region
      %100 = dma.done [#allocation7], 512
    $region33: #{_rnn_seq_padded.1} parent=1 // pred_fallthru
      _
    // Predicated region
    $region34: #{_rnn_seq_padded.1} parent=1 // pred_check
      _
    $region35: #{_rnn_seq_padded.1} parent=1 // pred_check_branch
      %102 = sbr.rel (0) target = $region37
    $region36: #{_rnn_seq_padded.1} parent=1 // pred_region
      %104 = dma.done [#allocation7], 65536
    $region37: #{_rnn_seq_padded.1} parent=1 // pred_fallthru
      _
    // Predicated region
    $region38: #{_rnn_seq_padded.1} parent=1 // pred_check
      _
    $region39: #{_rnn_seq_padded.1} parent=1 // pred_check_branch
      %106 = sbr.rel (0) target = $region41
    $region40: #{_rnn_seq_padded.1} parent=1 // pred_region
      %108 = dma.done [#allocation10], 256
    $region41: #{_rnn_seq_padded.1} parent=1 // pred_fallthru
      _
    // Predicated region
    $region42: #{_rnn_seq_padded.1} parent=1 // pred_check
      _
    $region43: #{_rnn_seq_padded.1} parent=1 // pred_check_branch
      %110 = sbr.rel (0) target = $region45
    $region44: #{_rnn_seq_padded.1} parent=1 // pred_region
      %112 = dma.done [#allocation10], 2048
    $region45: #{_rnn_seq_padded.1} parent=1 // pred_fallthru
      _
    // Predicated region
    $region46: #{_rnn_seq_padded.1} parent=1 // pred_check
      _
    $region47: #{_rnn_seq_padded.1} parent=1 // pred_check_branch
      %114 = sbr.rel (0) target = $region49
    $region48: #{_rnn_seq_padded.1} parent=1 // pred_region
      %116 = dma.done [#allocation13], 16
    $region49: #{_rnn_seq_padded.1} parent=1 // pred_fallthru
      _
    %p117 = scmp.eq.s32.totalorder 0, 0
    // Predicated region
    $region50: #{_rnn_seq_padded.1} parent=1 // pred_check
      %p118 = pneg %p117
    $region51: #{_rnn_seq_padded.1} parent=1 // pred_check_branch
      %120 = sbr.rel (%p118) target = $region53
    $region52: #{_rnn_seq_padded.1} parent=1 // pred_region
      %v121 = vld [vmem:[#allocation6] sm:$0xff]
      %v122 = vld [vmem:[#allocation6 + $0x8] sm:$0xff]
      %v123 = vld [vmem:[#allocation6 + $0x10] sm:$0xff]
      %v124 = vld [vmem:[#allocation6 + $0x18] sm:$0xff]
      %125 = vst [vmem:[#allocation2] sm:$0xff] %v121
      %126 = vst [vmem:[#allocation2 + $0x8] sm:$0xff] %v122
      %127 = vst [vmem:[#allocation2 + $0x10] sm:$0xff] %v123
      %128 = vst [vmem:[#allocation2 + $0x18] sm:$0xff] %v124
    $region53: #{_rnn_seq_padded.1} parent=1 // pred_fallthru
      _
    %v129 = vld [vmem:[#allocation3] sm:$0xff]
    %v130 = vld [vmem:[#allocation2] sm:$0xff]
    %v131 = vld [vmem:[#allocation8] sm:$0xff]
    %v132 = vld [vmem:[#allocation8 + $0x8] sm:$0xff]
    %v133 = vld [vmem:[#allocation8 + $0x10] sm:$0xff]
    %v134 = vld [vmem:[#allocation8 + $0x18] sm:$0xff]
    %v135 = vld [vmem:[#allocation8 + $0x20] sm:$0xff]
    %v136 = vld [vmem:[#allocation8 + $0x28] sm:$0xff]
    %v137 = vld [vmem:[#allocation8 + $0x30] sm:$0xff]
    %v138 = vld [vmem:[#allocation8 + $0x38] sm:$0xff]
    %v139 = vld [vmem:[#allocation8 + $0x40] sm:$0xff]
    %v140 = vld [vmem:[#allocation8 + $0x48] sm:$0xff]
    %v141 = vld [vmem:[#allocation8 + $0x50] sm:$0xff]
    %v142 = vld [vmem:[#allocation8 + $0x58] sm:$0xff]
    %v143 = vld [vmem:[#allocation8 + $0x60] sm:$0xff]
    %v144 = vld [vmem:[#allocation8 + $0x68] sm:$0xff]
    %v145 = vld [vmem:[#allocation8 + $0x70] sm:$0xff]
    %v146 = vld [vmem:[#allocation8 + $0x78] sm:$0xff]
    %v147 = vld [vmem:[#allocation8 + $0x80] sm:$0xff]
    %v148 = vld [vmem:[#allocation8 + $0x88] sm:$0xff]
    %v149 = vld [vmem:[#allocation8 + $0x90] sm:$0xff]
    %v150 = vld [vmem:[#allocation8 + $0x98] sm:$0xff]
    %v151 = vld [vmem:[#allocation8 + $0xa0] sm:$0xff]
    %v152 = vld [vmem:[#allocation8 + $0xa8] sm:$0xff]
    %v153 = vld [vmem:[#allocation8 + $0xb0] sm:$0xff]
    %v154 = vld [vmem:[#allocation8 + $0xb8] sm:$0xff]
    %v155 = vld [vmem:[#allocation8 + $0xc0] sm:$0xff]
    %v156 = vld [vmem:[#allocation8 + $0xc8] sm:$0xff]
    %v157 = vld [vmem:[#allocation8 + $0xd0] sm:$0xff]
    %v158 = vld [vmem:[#allocation8 + $0xd8] sm:$0xff]
    %v159 = vld [vmem:[#allocation8 + $0xe0] sm:$0xff]
    %v160 = vld [vmem:[#allocation8 + $0xe8] sm:$0xff]
    %v161 = vld [vmem:[#allocation8 + $0xf0] sm:$0xff]
    %v162 = vld [vmem:[#allocation8 + $0xf8] sm:$0xff]
    %v163 = vld [vmem:[#allocation8 + $0x100] sm:$0xff]
    %v164 = vld [vmem:[#allocation8 + $0x108] sm:$0xff]
    %v165 = vld [vmem:[#allocation8 + $0x110] sm:$0xff]
    %v166 = vld [vmem:[#allocation8 + $0x118] sm:$0xff]
    %v167 = vld [vmem:[#allocation8 + $0x120] sm:$0xff]
    %v168 = vld [vmem:[#allocation8 + $0x128] sm:$0xff]
    %v169 = vld [vmem:[#allocation8 + $0x130] sm:$0xff]
    %v170 = vld [vmem:[#allocation8 + $0x138] sm:$0xff]
    %v171 = vld [vmem:[#allocation8 + $0x140] sm:$0xff]
    %v172 = vld [vmem:[#allocation8 + $0x148] sm:$0xff]
    %v173 = vld [vmem:[#allocation8 + $0x150] sm:$0xff]
    %v174 = vld [vmem:[#allocation8 + $0x158] sm:$0xff]
    %v175 = vld [vmem:[#allocation8 + $0x160] sm:$0xff]
    %v176 = vld [vmem:[#allocation8 + $0x168] sm:$0xff]
    %v177 = vld [vmem:[#allocation8 + $0x170] sm:$0xff]
    %v178 = vld [vmem:[#allocation8 + $0x178] sm:$0xff]
    %v179 = vld [vmem:[#allocation8 + $0x180] sm:$0xff]
    %v180 = vld [vmem:[#allocation8 + $0x188] sm:$0xff]
    %v181 = vld [vmem:[#allocation8 + $0x190] sm:$0xff]
    %v182 = vld [vmem:[#allocation8 + $0x198] sm:$0xff]
    %v183 = vld [vmem:[#allocation8 + $0x1a0] sm:$0xff]
    %v184 = vld [vmem:[#allocation8 + $0x1a8] sm:$0xff]
    %v185 = vld [vmem:[#allocation8 + $0x1b0] sm:$0xff]
    %v186 = vld [vmem:[#allocation8 + $0x1b8] sm:$0xff]
    %v187 = vld [vmem:[#allocation8 + $0x1c0] sm:$0xff]
    %v188 = vld [vmem:[#allocation8 + $0x1c8] sm:$0xff]
    %v189 = vld [vmem:[#allocation8 + $0x1d0] sm:$0xff]
    %v190 = vld [vmem:[#allocation8 + $0x1d8] sm:$0xff]
    %v191 = vld [vmem:[#allocation8 + $0x1e0] sm:$0xff]
    %v192 = vld [vmem:[#allocation8 + $0x1e8] sm:$0xff]
    %v193 = vld [vmem:[#allocation8 + $0x1f0] sm:$0xff]
    %v194 = vld [vmem:[#allocation8 + $0x1f8] sm:$0xff]
    %v195 = vld [vmem:[#allocation8 + $0x200] sm:$0xff]
    %v196 = vld [vmem:[#allocation8 + $0x208] sm:$0xff]
    %v197 = vld [vmem:[#allocation8 + $0x210] sm:$0xff]
    %v198 = vld [vmem:[#allocation8 + $0x218] sm:$0xff]
    %v199 = vld [vmem:[#allocation8 + $0x220] sm:$0xff]
    %v200 = vld [vmem:[#allocation8 + $0x228] sm:$0xff]
    %v201 = vld [vmem:[#allocation8 + $0x230] sm:$0xff]
    %v202 = vld [vmem:[#allocation8 + $0x238] sm:$0xff]
    %v203 = vld [vmem:[#allocation8 + $0x240] sm:$0xff]
    %v204 = vld [vmem:[#allocation8 + $0x248] sm:$0xff]
    %v205 = vld [vmem:[#allocation8 + $0x250] sm:$0xff]
    %v206 = vld [vmem:[#allocation8 + $0x258] sm:$0xff]
    %v207 = vld [vmem:[#allocation8 + $0x260] sm:$0xff]
    %v208 = vld [vmem:[#allocation8 + $0x268] sm:$0xff]
    %v209 = vld [vmem:[#allocation8 + $0x270] sm:$0xff]
    %v210 = vld [vmem:[#allocation8 + $0x278] sm:$0xff]
    %v211 = vld [vmem:[#allocation8 + $0x280] sm:$0xff]
    %v212 = vld [vmem:[#allocation8 + $0x288] sm:$0xff]
    %v213 = vld [vmem:[#allocation8 + $0x290] sm:$0xff]
    %v214 = vld [vmem:[#allocation8 + $0x298] sm:$0xff]
    %v215 = vld [vmem:[#allocation8 + $0x2a0] sm:$0xff]
    %v216 = vld [vmem:[#allocation8 + $0x2a8] sm:$0xff]
    %v217 = vld [vmem:[#allocation8 + $0x2b0] sm:$0xff]
    %v218 = vld [vmem:[#allocation8 + $0x2b8] sm:$0xff]
    %v219 = vld [vmem:[#allocation8 + $0x2c0] sm:$0xff]
    %v220 = vld [vmem:[#allocation8 + $0x2c8] sm:$0xff]
    %v221 = vld [vmem:[#allocation8 + $0x2d0] sm:$0xff]
    %v222 = vld [vmem:[#allocation8 + $0x2d8] sm:$0xff]
    %v223 = vld [vmem:[#allocation8 + $0x2e0] sm:$0xff]
    %v224 = vld [vmem:[#allocation8 + $0x2e8] sm:$0xff]
    %v225 = vld [vmem:[#allocation8 + $0x2f0] sm:$0xff]
    %v226 = vld [vmem:[#allocation8 + $0x2f8] sm:$0xff]
    %v227 = vld [vmem:[#allocation8 + $0x300] sm:$0xff]
    %v228 = vld [vmem:[#allocation8 + $0x308] sm:$0xff]
    %v229 = vld [vmem:[#allocation8 + $0x310] sm:$0xff]
    %v230 = vld [vmem:[#allocation8 + $0x318] sm:$0xff]
    %v231 = vld [vmem:[#allocation8 + $0x320] sm:$0xff]
    %v232 = vld [vmem:[#allocation8 + $0x328] sm:$0xff]
    %v233 = vld [vmem:[#allocation8 + $0x330] sm:$0xff]
    %v234 = vld [vmem:[#allocation8 + $0x338] sm:$0xff]
    %v235 = vld [vmem:[#allocation8 + $0x340] sm:$0xff]
    %v236 = vld [vmem:[#allocation8 + $0x348] sm:$0xff]
    %v237 = vld [vmem:[#allocation8 + $0x350] sm:$0xff]
    %v238 = vld [vmem:[#allocation8 + $0x358] sm:$0xff]
    %v239 = vld [vmem:[#allocation8 + $0x360] sm:$0xff]
    %v240 = vld [vmem:[#allocation8 + $0x368] sm:$0xff]
    %v241 = vld [vmem:[#allocation8 + $0x370] sm:$0xff]
    %v242 = vld [vmem:[#allocation8 + $0x378] sm:$0xff]
    %v243 = vld [vmem:[#allocation8 + $0x380] sm:$0xff]
    %v244 = vld [vmem:[#allocation8 + $0x388] sm:$0xff]
    %v245 = vld [vmem:[#allocation8 + $0x390] sm:$0xff]
    %v246 = vld [vmem:[#allocation8 + $0x398] sm:$0xff]
    %v247 = vld [vmem:[#allocation8 + $0x3a0] sm:$0xff]
    %v248 = vld [vmem:[#allocation8 + $0x3a8] sm:$0xff]
    %v249 = vld [vmem:[#allocation8 + $0x3b0] sm:$0xff]
    %v250 = vld [vmem:[#allocation8 + $0x3b8] sm:$0xff]
    %v251 = vld [vmem:[#allocation8 + $0x3c0] sm:$0xff]
    %v252 = vld [vmem:[#allocation8 + $0x3c8] sm:$0xff]
    %v253 = vld [vmem:[#allocation8 + $0x3d0] sm:$0xff]
    %v254 = vld [vmem:[#allocation8 + $0x3d8] sm:$0xff]
    %v255 = vld [vmem:[#allocation8 + $0x3e0] sm:$0xff]
    %v256 = vld [vmem:[#allocation8 + $0x3e8] sm:$0xff]
    %v257 = vld [vmem:[#allocation8 + $0x3f0] sm:$0xff]
    %v258 = vld [vmem:[#allocation8 + $0x3f8] sm:$0xff]
    %v259 = vld [vmem:[#allocation9] sm:$0xf]
    %v261 = vperm.slane %v259, 0
    %v262 = vperm.slane %v259, 1
    %v263 = vperm.slane %v259, 2
    %v264 = vperm.slane %v259, 3
    %269 = vmatpush.msra.mxu0 %v191
    %270 = vmatpush.msra.mxu0 %v187
    %271 = vmatpush.msra.mxu0 %v183
    %272 = vmatpush.msra.mxu0 %v179
    %273 = vmatpush.msra.mxu0 %v175
    %274 = vmatpush.msra.mxu0 %v171
    %275 = vmatpush.msra.mxu0 %v167
    %276 = vmatpush.msra.mxu0 %v163
    %277 = vmatpush.msra.mxu0 %v159
    %278 = vmatpush.msra.mxu0 %v155
    %279 = vmatpush.msra.mxu0 %v151
    %280 = vmatpush.msra.mxu0 %v147
    %281 = vmatpush.msra.mxu0 %v143
    %282 = vmatpush.msra.mxu0 %v139
    %283 = vmatpush.msra.mxu0 %v135
    %284 = vmatpush.msra.mxu0 %v131
    %285 = vmatmul.f32.gmra.mxu0 %v129
    %v286 = vpop.f32.mrf.mxu0
    %v287 = vadd.f32 %v261, %v286
    %288 = vdwg.mxu0
    %289 = vmatpush.msra.mxu0 %v255
    %290 = vmatpush.msra.mxu0 %v251
    %291 = vmatpush.msra.mxu0 %v247
    %292 = vmatpush.msra.mxu0 %v243
    %293 = vmatpush.msra.mxu0 %v239
    %294 = vmatpush.msra.mxu0 %v235
    %295 = vmatpush.msra.mxu0 %v231
    %296 = vmatpush.msra.mxu0 %v227
    %297 = vmatpush.msra.mxu0 %v223
    %298 = vmatpush.msra.mxu0 %v219
    %299 = vmatpush.msra.mxu0 %v215
    %300 = vmatpush.msra.mxu0 %v211
    %301 = vmatpush.msra.mxu0 %v207
    %302 = vmatpush.msra.mxu0 %v203
    %303 = vmatpush.msra.mxu0 %v199
    %304 = vmatpush.msra.mxu0 %v195
    %305 = vmatmul.f32.gmra.mxu0 %v130
    %v306 = vpop.f32.mrf.mxu0
    %v307 = vadd.f32 %v287, %v306
    %308 = vdwg.mxu0
    %309 = vmatpush.msra.mxu0 %v192
    %310 = vmatpush.msra.mxu0 %v188
    %311 = vmatpush.msra.mxu0 %v184
    %312 = vmatpush.msra.mxu0 %v180
    %313 = vmatpush.msra.mxu0 %v176
    %314 = vmatpush.msra.mxu0 %v172
    %315 = vmatpush.msra.mxu0 %v168
    %316 = vmatpush.msra.mxu0 %v164
    %317 = vmatpush.msra.mxu0 %v160
    %318 = vmatpush.msra.mxu0 %v156
    %319 = vmatpush.msra.mxu0 %v152
    %320 = vmatpush.msra.mxu0 %v148
    %321 = vmatpush.msra.mxu0 %v144
    %322 = vmatpush.msra.mxu0 %v140
    %323 = vmatpush.msra.mxu0 %v136
    %324 = vmatpush.msra.mxu0 %v132
    %325 = vmatmul.f32.gmra.mxu0 %v129
    %v326 = vpop.f32.mrf.mxu0
    %v327 = vadd.f32 %v262, %v326
    %328 = vdwg.mxu0
    %329 = vmatpush.msra.mxu0 %v256
    %330 = vmatpush.msra.mxu0 %v252
    %331 = vmatpush.msra.mxu0 %v248
    %332 = vmatpush.msra.mxu0 %v244
    %333 = vmatpush.msra.mxu0 %v240
    %334 = vmatpush.msra.mxu0 %v236
    %335 = vmatpush.msra.mxu0 %v232
    %336 = vmatpush.msra.mxu0 %v228
    %337 = vmatpush.msra.mxu0 %v224
    %338 = vmatpush.msra.mxu0 %v220
    %339 = vmatpush.msra.mxu0 %v216
    %340 = vmatpush.msra.mxu0 %v212
    %341 = vmatpush.msra.mxu0 %v208
    %342 = vmatpush.msra.mxu0 %v204
    %343 = vmatpush.msra.mxu0 %v200
    %344 = vmatpush.msra.mxu0 %v196
    %345 = vmatmul.f32.gmra.mxu0 %v130
    %v346 = vpop.f32.mrf.mxu0
    %v347 = vadd.f32 %v327, %v346
    %348 = vdwg.mxu0
    %349 = vmatpush.msra.mxu0 %v193
    %350 = vmatpush.msra.mxu0 %v189
    %351 = vmatpush.msra.mxu0 %v185
    %352 = vmatpush.msra.mxu0 %v181
    %353 = vmatpush.msra.mxu0 %v177
    %354 = vmatpush.msra.mxu0 %v173
    %355 = vmatpush.msra.mxu0 %v169
    %356 = vmatpush.msra.mxu0 %v165
    %357 = vmatpush.msra.mxu0 %v161
    %358 = vmatpush.msra.mxu0 %v157
    %359 = vmatpush.msra.mxu0 %v153
    %360 = vmatpush.msra.mxu0 %v149
    %361 = vmatpush.msra.mxu0 %v145
    %362 = vmatpush.msra.mxu0 %v141
    %363 = vmatpush.msra.mxu0 %v137
    %364 = vmatpush.msra.mxu0 %v133
    %365 = vmatmul.f32.gmra.mxu0 %v129
    %v366 = vpop.f32.mrf.mxu0
    %v367 = vadd.f32 %v263, %v366
    %368 = vdwg.mxu0
    %369 = vmatpush.msra.mxu0 %v257
    %370 = vmatpush.msra.mxu0 %v253
    %371 = vmatpush.msra.mxu0 %v249
    %372 = vmatpush.msra.mxu0 %v245
    %373 = vmatpush.msra.mxu0 %v241
    %374 = vmatpush.msra.mxu0 %v237
    %375 = vmatpush.msra.mxu0 %v233
    %376 = vmatpush.msra.mxu0 %v229
    %377 = vmatpush.msra.mxu0 %v225
    %378 = vmatpush.msra.mxu0 %v221
    %379 = vmatpush.msra.mxu0 %v217
    %380 = vmatpush.msra.mxu0 %v213
    %381 = vmatpush.msra.mxu0 %v209
    %382 = vmatpush.msra.mxu0 %v205
    %383 = vmatpush.msra.mxu0 %v201
    %384 = vmatpush.msra.mxu0 %v197
    %385 = vmatmul.f32.gmra.mxu0 %v130
    %v386 = vpop.f32.mrf.mxu0
    %v387 = vadd.f32 %v367, %v386
    %388 = vdwg.mxu0
    %389 = vmatpush.msra.mxu0 %v194
    %390 = vmatpush.msra.mxu0 %v190
    %391 = vmatpush.msra.mxu0 %v186
    %392 = vmatpush.msra.mxu0 %v182
    %393 = vmatpush.msra.mxu0 %v178
    %394 = vmatpush.msra.mxu0 %v174
    %395 = vmatpush.msra.mxu0 %v170
    %396 = vmatpush.msra.mxu0 %v166
    %397 = vmatpush.msra.mxu0 %v162
    %398 = vmatpush.msra.mxu0 %v158
    %399 = vmatpush.msra.mxu0 %v154
    %400 = vmatpush.msra.mxu0 %v150
    %401 = vmatpush.msra.mxu0 %v146
    %402 = vmatpush.msra.mxu0 %v142
    %403 = vmatpush.msra.mxu0 %v138
    %404 = vmatpush.msra.mxu0 %v134
    %405 = vmatmul.f32.gmra.mxu0 %v129
    %v406 = vpop.f32.mrf.mxu0
    %v407 = vadd.f32 %v264, %v406
    %408 = vdwg.mxu0
    %409 = vmatpush.msra.mxu0 %v258
    %410 = vmatpush.msra.mxu0 %v254
    %411 = vmatpush.msra.mxu0 %v250
    %412 = vmatpush.msra.mxu0 %v246
    %413 = vmatpush.msra.mxu0 %v242
    %414 = vmatpush.msra.mxu0 %v238
    %415 = vmatpush.msra.mxu0 %v234
    %416 = vmatpush.msra.mxu0 %v230
    %417 = vmatpush.msra.mxu0 %v226
    %418 = vmatpush.msra.mxu0 %v222
    %419 = vmatpush.msra.mxu0 %v218
    %420 = vmatpush.msra.mxu0 %v214
    %421 = vmatpush.msra.mxu0 %v210
    %422 = vmatpush.msra.mxu0 %v206
    %423 = vmatpush.msra.mxu0 %v202
    %424 = vmatpush.msra.mxu0 %v198
    %425 = vmatmul.f32.gmra.mxu0 %v130
    %v426 = vpop.f32.mrf.mxu0
    %v427 = vadd.f32 %v407, %v426
    %428 = vdwg.mxu0
    %v429 = vxor.u32 %v307, 2147483648
    %v430 = vxor.u32 %v347, 2147483648
    %v431 = vmul.f32 %v429, 1.442695
    %v432 = vpow.pop %v431
    %v433 = vmul.f32 %v430, 1.442695
    %v434 = vpow.pop %v433
    %v435 = vadd.f32 %v432, 1.0
    %v436 = vadd.f32 %v434, 1.0
    %v437 = vrcp.pop %v435
    %v438 = vmul.f32 %v435, %v437
    %v439 = vsub.f32 1.0, %v438
    %v440 = vmul.f32 %v437, %v439
    %v441 = vadd.f32 %v437, %v440
    %vm442 = vweird.f32 %v435
    %vm443 = vweird.f32 %v437
    %vm444 = vmor %vm442, %vm443
    %v445 = vsel %vm444, %v437, %v441
    %v446 = vand.u32 2147483647, %v435
    %vm447 = vcmp.eq.f32.partialorder %v446, 8.507059e+37
    %v448 = vand.u32 %v435, 2147483648
    %v449 = vor.u32 1.1754944e-38, %v448
    %v450 = vsel %vm447, %v449, %v445
    %v451 = vmul.f32 1.0, %v450
    %v452 = vrcp.pop %v436
    %v453 = vmul.f32 %v436, %v452
    %v454 = vsub.f32 1.0, %v453
    %v455 = vmul.f32 %v452, %v454
    %v456 = vadd.f32 %v452, %v455
    %vm457 = vweird.f32 %v436
    %vm458 = vweird.f32 %v452
    %vm459 = vmor %vm457, %vm458
    %v460 = vsel %vm459, %v452, %v456
    %v461 = vand.u32 2147483647, %v436
    %vm462 = vcmp.eq.f32.partialorder %v461, 8.507059e+37
    %v463 = vand.u32 %v436, 2147483648
    %v464 = vor.u32 1.1754944e-38, %v463
    %v465 = vsel %vm462, %v464, %v460
    %v466 = vmul.f32 1.0, %v465
    %v467 = vmul.f32 %v451, %v427
    %v468 = vadd.f32 %v387, %v467
    %v469 = vtanh.pop %v468
    %v470 = vsub.f32 %v130, %v469
    %v471 = vmul.f32 %v466, %v470
    %v472 = vadd.f32 %v469, %v471
    %473 = vst [vmem:[#allocation2] sm:$0xff] %v472
    %s474 = scalar_lea.vmem [#allocation2], 8
    %v475 = vld [vmem:[%s474] sm:$0xff]
    %s476 = scalar_lea.vmem [#allocation8], 1024
    %v477 = vld [vmem:[%s476] sm:$0xff]
    %v478 = vld [vmem:[%s476 + $0x8] sm:$0xff]
    %v479 = vld [vmem:[%s476 + $0x10] sm:$0xff]
    %v480 = vld [vmem:[%s476 + $0x18] sm:$0xff]
    %v481 = vld [vmem:[%s476 + $0x20] sm:$0xff]
    %v482 = vld [vmem:[%s476 + $0x28] sm:$0xff]
    %v483 = vld [vmem:[%s476 + $0x30] sm:$0xff]
    %v484 = vld [vmem:[%s476 + $0x38] sm:$0xff]
    %v485 = vld [vmem:[%s476 + $0x40] sm:$0xff]
    %v486 = vld [vmem:[%s476 + $0x48] sm:$0xff]
    %v487 = vld [vmem:[%s476 + $0x50] sm:$0xff]
    %v488 = vld [vmem:[%s476 + $0x58] sm:$0xff]
    %v489 = vld [vmem:[%s476 + $0x60] sm:$0xff]
    %v490 = vld [vmem:[%s476 + $0x68] sm:$0xff]
    %v491 = vld [vmem:[%s476 + $0x70] sm:$0xff]
    %v492 = vld [vmem:[%s476 + $0x78] sm:$0xff]
    %v493 = vld [vmem:[%s476 + $0x80] sm:$0xff]
    %v494 = vld [vmem:[%s476 + $0x88] sm:$0xff]
    %v495 = vld [vmem:[%s476 + $0x90] sm:$0xff]
    %v496 = vld [vmem:[%s476 + $0x98] sm:$0xff]
    %v497 = vld [vmem:[%s476 + $0xa0] sm:$0xff]
    %v498 = vld [vmem:[%s476 + $0xa8] sm:$0xff]
    %v499 = vld [vmem:[%s476 + $0xb0] sm:$0xff]
    %v500 = vld [vmem:[%s476 + $0xb8] sm:$0xff]
    %v501 = vld [vmem:[%s476 + $0xc0] sm:$0xff]
    %v502 = vld [vmem:[%s476 + $0xc8] sm:$0xff]
    %v503 = vld [vmem:[%s476 + $0xd0] sm:$0xff]
    %v504 = vld [vmem:[%s476 + $0xd8] sm:$0xff]
    %v505 = vld [vmem:[%s476 + $0xe0] sm:$0xff]
    %v506 = vld [vmem:[%s476 + $0xe8] sm:$0xff]
    %v507 = vld [vmem:[%s476 + $0xf0] sm:$0xff]
    %v508 = vld [vmem:[%s476 + $0xf8] sm:$0xff]
    %v509 = vld [vmem:[%s476 + $0x100] sm:$0xff]
    %v510 = vld [vmem:[%s476 + $0x108] sm:$0xff]
    %v511 = vld [vmem:[%s476 + $0x110] sm:$0xff]
    %v512 = vld [vmem:[%s476 + $0x118] sm:$0xff]
    %v513 = vld [vmem:[%s476 + $0x120] sm:$0xff]
    %v514 = vld [vmem:[%s476 + $0x128] sm:$0xff]
    %v515 = vld [vmem:[%s476 + $0x130] sm:$0xff]
    %v516 = vld [vmem:[%s476 + $0x138] sm:$0xff]
    %v517 = vld [vmem:[%s476 + $0x140] sm:$0xff]
    %v518 = vld [vmem:[%s476 + $0x148] sm:$0xff]
    %v519 = vld [vmem:[%s476 + $0x150] sm:$0xff]
    %v520 = vld [vmem:[%s476 + $0x158] sm:$0xff]
    %v521 = vld [vmem:[%s476 + $0x160] sm:$0xff]
    %v522 = vld [vmem:[%s476 + $0x168] sm:$0xff]
    %v523 = vld [vmem:[%s476 + $0x170] sm:$0xff]
    %v524 = vld [vmem:[%s476 + $0x178] sm:$0xff]
    %v525 = vld [vmem:[%s476 + $0x180] sm:$0xff]
    %v526 = vld [vmem:[%s476 + $0x188] sm:$0xff]
    %v527 = vld [vmem:[%s476 + $0x190] sm:$0xff]
    %v528 = vld [vmem:[%s476 + $0x198] sm:$0xff]
    %v529 = vld [vmem:[%s476 + $0x1a0] sm:$0xff]
    %v530 = vld [vmem:[%s476 + $0x1a8] sm:$0xff]
    %v531 = vld [vmem:[%s476 + $0x1b0] sm:$0xff]
    %v532 = vld [vmem:[%s476 + $0x1b8] sm:$0xff]
    %v533 = vld [vmem:[%s476 + $0x1c0] sm:$0xff]
    %v534 = vld [vmem:[%s476 + $0x1c8] sm:$0xff]
    %v535 = vld [vmem:[%s476 + $0x1d0] sm:$0xff]
    %v536 = vld [vmem:[%s476 + $0x1d8] sm:$0xff]
    %v537 = vld [vmem:[%s476 + $0x1e0] sm:$0xff]
    %v538 = vld [vmem:[%s476 + $0x1e8] sm:$0xff]
    %v539 = vld [vmem:[%s476 + $0x1f0] sm:$0xff]
    %v540 = vld [vmem:[%s476 + $0x1f8] sm:$0xff]
    %v541 = vld [vmem:[%s476 + $0x200] sm:$0xff]
    %v542 = vld [vmem:[%s476 + $0x208] sm:$0xff]
    %v543 = vld [vmem:[%s476 + $0x210] sm:$0xff]
    %v544 = vld [vmem:[%s476 + $0x218] sm:$0xff]
    %v545 = vld [vmem:[%s476 + $0x220] sm:$0xff]
    %v546 = vld [vmem:[%s476 + $0x228] sm:$0xff]
    %v547 = vld [vmem:[%s476 + $0x230] sm:$0xff]
    %v548 = vld [vmem:[%s476 + $0x238] sm:$0xff]
    %v549 = vld [vmem:[%s476 + $0x240] sm:$0xff]
    %v550 = vld [vmem:[%s476 + $0x248] sm:$0xff]
    %v551 = vld [vmem:[%s476 + $0x250] sm:$0xff]
    %v552 = vld [vmem:[%s476 + $0x258] sm:$0xff]
    %v553 = vld [vmem:[%s476 + $0x260] sm:$0xff]
    %v554 = vld [vmem:[%s476 + $0x268] sm:$0xff]
    %v555 = vld [vmem:[%s476 + $0x270] sm:$0xff]
    %v556 = vld [vmem:[%s476 + $0x278] sm:$0xff]
    %v557 = vld [vmem:[%s476 + $0x280] sm:$0xff]
    %v558 = vld [vmem:[%s476 + $0x288] sm:$0xff]
    %v559 = vld [vmem:[%s476 + $0x290] sm:$0xff]
    %v560 = vld [vmem:[%s476 + $0x298] sm:$0xff]
    %v561 = vld [vmem:[%s476 + $0x2a0] sm:$0xff]
    %v562 = vld [vmem:[%s476 + $0x2a8] sm:$0xff]
    %v563 = vld [vmem:[%s476 + $0x2b0] sm:$0xff]
    %v564 = vld [vmem:[%s476 + $0x2b8] sm:$0xff]
    %v565 = vld [vmem:[%s476 + $0x2c0] sm:$0xff]
    %v566 = vld [vmem:[%s476 + $0x2c8] sm:$0xff]
    %v567 = vld [vmem:[%s476 + $0x2d0] sm:$0xff]
    %v568 = vld [vmem:[%s476 + $0x2d8] sm:$0xff]
    %v569 = vld [vmem:[%s476 + $0x2e0] sm:$0xff]
    %v570 = vld [vmem:[%s476 + $0x2e8] sm:$0xff]
    %v571 = vld [vmem:[%s476 + $0x2f0] sm:$0xff]
    %v572 = vld [vmem:[%s476 + $0x2f8] sm:$0xff]
    %v573 = vld [vmem:[%s476 + $0x300] sm:$0xff]
    %v574 = vld [vmem:[%s476 + $0x308] sm:$0xff]
    %v575 = vld [vmem:[%s476 + $0x310] sm:$0xff]
    %v576 = vld [vmem:[%s476 + $0x318] sm:$0xff]
    %v577 = vld [vmem:[%s476 + $0x320] sm:$0xff]
    %v578 = vld [vmem:[%s476 + $0x328] sm:$0xff]
    %v579 = vld [vmem:[%s476 + $0x330] sm:$0xff]
    %v580 = vld [vmem:[%s476 + $0x338] sm:$0xff]
    %v581 = vld [vmem:[%s476 + $0x340] sm:$0xff]
    %v582 = vld [vmem:[%s476 + $0x348] sm:$0xff]
    %v583 = vld [vmem:[%s476 + $0x350] sm:$0xff]
    %v584 = vld [vmem:[%s476 + $0x358] sm:$0xff]
    %v585 = vld [vmem:[%s476 + $0x360] sm:$0xff]
    %v586 = vld [vmem:[%s476 + $0x368] sm:$0xff]
    %v587 = vld [vmem:[%s476 + $0x370] sm:$0xff]
    %v588 = vld [vmem:[%s476 + $0x378] sm:$0xff]
    %v589 = vld [vmem:[%s476 + $0x380] sm:$0xff]
    %v590 = vld [vmem:[%s476 + $0x388] sm:$0xff]
    %v591 = vld [vmem:[%s476 + $0x390] sm:$0xff]
    %v592 = vld [vmem:[%s476 + $0x398] sm:$0xff]
    %v593 = vld [vmem:[%s476 + $0x3a0] sm:$0xff]
    %v594 = vld [vmem:[%s476 + $0x3a8] sm:$0xff]
    %v595 = vld [vmem:[%s476 + $0x3b0] sm:$0xff]
    %v596 = vld [vmem:[%s476 + $0x3b8] sm:$0xff]
    %v597 = vld [vmem:[%s476 + $0x3c0] sm:$0xff]
    %v598 = vld [vmem:[%s476 + $0x3c8] sm:$0xff]
    %v599 = vld [vmem:[%s476 + $0x3d0] sm:$0xff]
    %v600 = vld [vmem:[%s476 + $0x3d8] sm:$0xff]
    %v601 = vld [vmem:[%s476 + $0x3e0] sm:$0xff]
    %v602 = vld [vmem:[%s476 + $0x3e8] sm:$0xff]
    %v603 = vld [vmem:[%s476 + $0x3f0] sm:$0xff]
    %v604 = vld [vmem:[%s476 + $0x3f8] sm:$0xff]
    %s605 = scalar_lea.vmem [#allocation9], 4
    %v606 = vld [vmem:[%s605] sm:$0xf]
    %v608 = vperm.slane %v606, 0
    %v609 = vperm.slane %v606, 1
    %v610 = vperm.slane %v606, 2
    %v611 = vperm.slane %v606, 3
    %616 = vmatpush.msra.mxu0 %v537
    %617 = vmatpush.msra.mxu0 %v533
    %618 = vmatpush.msra.mxu0 %v529
    %619 = vmatpush.msra.mxu0 %v525
    %620 = vmatpush.msra.mxu0 %v521
    %621 = vmatpush.msra.mxu0 %v517
    %622 = vmatpush.msra.mxu0 %v513
    %623 = vmatpush.msra.mxu0 %v509
    %624 = vmatpush.msra.mxu0 %v505
    %625 = vmatpush.msra.mxu0 %v501
    %626 = vmatpush.msra.mxu0 %v497
    %627 = vmatpush.msra.mxu0 %v493
    %628 = vmatpush.msra.mxu0 %v489
    %629 = vmatpush.msra.mxu0 %v485
    %630 = vmatpush.msra.mxu0 %v481
    %631 = vmatpush.msra.mxu0 %v477
    %632 = vmatmul.f32.gmra.mxu0 %v472
    %v633 = vpop.f32.mrf.mxu0
    %v634 = vadd.f32 %v608, %v633
    %635 = vdwg.mxu0
    %636 = vmatpush.msra.mxu0 %v601
    %637 = vmatpush.msra.mxu0 %v597
    %638 = vmatpush.msra.mxu0 %v593
    %639 = vmatpush.msra.mxu0 %v589
    %640 = vmatpush.msra.mxu0 %v585
    %641 = vmatpush.msra.mxu0 %v581
    %642 = vmatpush.msra.mxu0 %v577
    %643 = vmatpush.msra.mxu0 %v573
    %644 = vmatpush.msra.mxu0 %v569
    %645 = vmatpush.msra.mxu0 %v565
    %646 = vmatpush.msra.mxu0 %v561
    %647 = vmatpush.msra.mxu0 %v557
    %648 = vmatpush.msra.mxu0 %v553
    %649 = vmatpush.msra.mxu0 %v549
    %650 = vmatpush.msra.mxu0 %v545
    %651 = vmatpush.msra.mxu0 %v541
    %652 = vmatmul.f32.gmra.mxu0 %v475
    %v653 = vpop.f32.mrf.mxu0
    %v654 = vadd.f32 %v634, %v653
    %655 = vdwg.mxu0
    %656 = vmatpush.msra.mxu0 %v538
    %657 = vmatpush.msra.mxu0 %v534
    %658 = vmatpush.msra.mxu0 %v530
    %659 = vmatpush.msra.mxu0 %v526
    %660 = vmatpush.msra.mxu0 %v522
    %661 = vmatpush.msra.mxu0 %v518
    %662 = vmatpush.msra.mxu0 %v514
    %663 = vmatpush.msra.mxu0 %v510
    %664 = vmatpush.msra.mxu0 %v506
    %665 = vmatpush.msra.mxu0 %v502
    %666 = vmatpush.msra.mxu0 %v498
    %667 = vmatpush.msra.mxu0 %v494
    %668 = vmatpush.msra.mxu0 %v490
    %669 = vmatpush.msra.mxu0 %v486
    %670 = vmatpush.msra.mxu0 %v482
    %671 = vmatpush.msra.mxu0 %v478
    %672 = vmatmul.f32.gmra.mxu0 %v472
    %v673 = vpop.f32.mrf.mxu0
    %v674 = vadd.f32 %v609, %v673
    %675 = vdwg.mxu0
    %676 = vmatpush.msra.mxu0 %v602
    %677 = vmatpush.msra.mxu0 %v598
    %678 = vmatpush.msra.mxu0 %v594
    %679 = vmatpush.msra.mxu0 %v590
    %680 = vmatpush.msra.mxu0 %v586
    %681 = vmatpush.msra.mxu0 %v582
    %682 = vmatpush.msra.mxu0 %v578
    %683 = vmatpush.msra.mxu0 %v574
    %684 = vmatpush.msra.mxu0 %v570
    %685 = vmatpush.msra.mxu0 %v566
    %686 = vmatpush.msra.mxu0 %v562
    %687 = vmatpush.msra.mxu0 %v558
    %688 = vmatpush.msra.mxu0 %v554
    %689 = vmatpush.msra.mxu0 %v550
    %690 = vmatpush.msra.mxu0 %v546
    %691 = vmatpush.msra.mxu0 %v542
    %692 = vmatmul.f32.gmra.mxu0 %v475
    %v693 = vpop.f32.mrf.mxu0
    %v694 = vadd.f32 %v674, %v693
    %695 = vdwg.mxu0
    %696 = vmatpush.msra.mxu0 %v539
    %697 = vmatpush.msra.mxu0 %v535
    %698 = vmatpush.msra.mxu0 %v531
    %699 = vmatpush.msra.mxu0 %v527
    %700 = vmatpush.msra.mxu0 %v523
    %701 = vmatpush.msra.mxu0 %v519
    %702 = vmatpush.msra.mxu0 %v515
    %703 = vmatpush.msra.mxu0 %v511
    %704 = vmatpush.msra.mxu0 %v507
    %705 = vmatpush.msra.mxu0 %v503
    %706 = vmatpush.msra.mxu0 %v499
    %707 = vmatpush.msra.mxu0 %v495
    %708 = vmatpush.msra.mxu0 %v491
    %709 = vmatpush.msra.mxu0 %v487
    %710 = vmatpush.msra.mxu0 %v483
    %711 = vmatpush.msra.mxu0 %v479
    %712 = vmatmul.f32.gmra.mxu0 %v472
    %v713 = vpop.f32.mrf.mxu0
    %v714 = vadd.f32 %v610, %v713
    %715 = vdwg.mxu0
    %716 = vmatpush.msra.mxu0 %v603
    %717 = vmatpush.msra.mxu0 %v599
    %718 = vmatpush.msra.mxu0 %v595
    %719 = vmatpush.msra.mxu0 %v591
    %720 = vmatpush.msra.mxu0 %v587
    %721 = vmatpush.msra.mxu0 %v583
    %722 = vmatpush.msra.mxu0 %v579
    %723 = vmatpush.msra.mxu0 %v575
    %724 = vmatpush.msra.mxu0 %v571
    %725 = vmatpush.msra.mxu0 %v567
    %726 = vmatpush.msra.mxu0 %v563
    %727 = vmatpush.msra.mxu0 %v559
    %728 = vmatpush.msra.mxu0 %v555
    %729 = vmatpush.msra.mxu0 %v551
    %730 = vmatpush.msra.mxu0 %v547
    %731 = vmatpush.msra.mxu0 %v543
    %732 = vmatmul.f32.gmra.mxu0 %v475
    %v733 = vpop.f32.mrf.mxu0
    %v734 = vadd.f32 %v714, %v733
    %735 = vdwg.mxu0
    %736 = vmatpush.msra.mxu0 %v540
    %737 = vmatpush.msra.mxu0 %v536
    %738 = vmatpush.msra.mxu0 %v532
    %739 = vmatpush.msra.mxu0 %v528
    %740 = vmatpush.msra.mxu0 %v524
    %741 = vmatpush.msra.mxu0 %v520
    %742 = vmatpush.msra.mxu0 %v516
    %743 = vmatpush.msra.mxu0 %v512
    %744 = vmatpush.msra.mxu0 %v508
    %745 = vmatpush.msra.mxu0 %v504
    %746 = vmatpush.msra.mxu0 %v500
    %747 = vmatpush.msra.mxu0 %v496
    %748 = vmatpush.msra.mxu0 %v492
    %749 = vmatpush.msra.mxu0 %v488
    %750 = vmatpush.msra.mxu0 %v484
    %751 = vmatpush.msra.mxu0 %v480
    %752 = vmatmul.f32.gmra.mxu0 %v472
    %v753 = vpop.f32.mrf.mxu0
    %v754 = vadd.f32 %v611, %v753
    %755 = vdwg.mxu0
    %756 = vmatpush.msra.mxu0 %v604
    %757 = vmatpush.msra.mxu0 %v600
    %758 = vmatpush.msra.mxu0 %v596
    %759 = vmatpush.msra.mxu0 %v592
    %760 = vmatpush.msra.mxu0 %v588
    %761 = vmatpush.msra.mxu0 %v584
    %762 = vmatpush.msra.mxu0 %v580
    %763 = vmatpush.msra.mxu0 %v576
    %764 = vmatpush.msra.mxu0 %v572
    %765 = vmatpush.msra.mxu0 %v568
    %766 = vmatpush.msra.mxu0 %v564
    %767 = vmatpush.msra.mxu0 %v560
    %768 = vmatpush.msra.mxu0 %v556
    %769 = vmatpush.msra.mxu0 %v552
    %770 = vmatpush.msra.mxu0 %v548
    %771 = vmatpush.msra.mxu0 %v544
    %772 = vmatmul.f32.gmra.mxu0 %v475
    %v773 = vpop.f32.mrf.mxu0
    %v774 = vadd.f32 %v754, %v773
    %775 = vdwg.mxu0
    %v776 = vxor.u32 %v654, 2147483648
    %v777 = vxor.u32 %v694, 2147483648
    %v778 = vmul.f32 %v776, 1.442695
    %v779 = vpow.pop %v778
    %v780 = vmul.f32 %v777, 1.442695
    %v781 = vpow.pop %v780
    %v782 = vadd.f32 %v779, 1.0
    %v783 = vadd.f32 %v781, 1.0
    %v784 = vrcp.pop %v782
    %v785 = vmul.f32 %v782, %v784
    %v786 = vsub.f32 1.0, %v785
    %v787 = vmul.f32 %v784, %v786
    %v788 = vadd.f32 %v784, %v787
    %vm789 = vweird.f32 %v782
    %vm790 = vweird.f32 %v784
    %vm791 = vmor %vm789, %vm790
    %v792 = vsel %vm791, %v784, %v788
    %v793 = vand.u32 2147483647, %v782
    %vm794 = vcmp.eq.f32.partialorder %v793, 8.507059e+37
    %v795 = vand.u32 %v782, 2147483648
    %v796 = vor.u32 1.1754944e-38, %v795
    %v797 = vsel %vm794, %v796, %v792
    %v798 = vmul.f32 1.0, %v797
    %v799 = vrcp.pop %v783
    %v800 = vmul.f32 %v783, %v799
    %v801 = vsub.f32 1.0, %v800
    %v802 = vmul.f32 %v799, %v801
    %v803 = vadd.f32 %v799, %v802
    %vm804 = vweird.f32 %v783
    %vm805 = vweird.f32 %v799
    %vm806 = vmor %vm804, %vm805
    %v807 = vsel %vm806, %v799, %v803
    %v808 = vand.u32 2147483647, %v783
    %vm809 = vcmp.eq.f32.partialorder %v808, 8.507059e+37
    %v810 = vand.u32 %v783, 2147483648
    %v811 = vor.u32 1.1754944e-38, %v810
    %v812 = vsel %vm809, %v811, %v807
    %v813 = vmul.f32 1.0, %v812
    %v814 = vmul.f32 %v798, %v774
    %v815 = vadd.f32 %v734, %v814
    %v816 = vtanh.pop %v815
    %v817 = vsub.f32 %v475, %v816
    %v818 = vmul.f32 %v813, %v817
    %v819 = vadd.f32 %v816, %v818
    %820 = vst [vmem:[%s474] sm:$0xff] %v819
    %s821 = scalar_lea.vmem [#allocation2], 16
    %v822 = vld [vmem:[%s821] sm:$0xff]
    %s823 = scalar_lea.vmem [#allocation8], 2048
    %v824 = vld [vmem:[%s823] sm:$0xff]
    %v825 = vld [vmem:[%s823 + $0x8] sm:$0xff]
    %v826 = vld [vmem:[%s823 + $0x10] sm:$0xff]
    %v827 = vld [vmem:[%s823 + $0x18] sm:$0xff]
    %v828 = vld [vmem:[%s823 + $0x20] sm:$0xff]
    %v829 = vld [vmem:[%s823 + $0x28] sm:$0xff]
    %v830 = vld [vmem:[%s823 + $0x30] sm:$0xff]
    %v831 = vld [vmem:[%s823 + $0x38] sm:$0xff]
    %v832 = vld [vmem:[%s823 + $0x40] sm:$0xff]
    %v833 = vld [vmem:[%s823 + $0x48] sm:$0xff]
    %v834 = vld [vmem:[%s823 + $0x50] sm:$0xff]
    %v835 = vld [vmem:[%s823 + $0x58] sm:$0xff]
    %v836 = vld [vmem:[%s823 + $0x60] sm:$0xff]
    %v837 = vld [vmem:[%s823 + $0x68] sm:$0xff]
    %v838 = vld [vmem:[%s823 + $0x70] sm:$0xff]
    %v839 = vld [vmem:[%s823 + $0x78] sm:$0xff]
    %v840 = vld [vmem:[%s823 + $0x80] sm:$0xff]
    %v841 = vld [vmem:[%s823 + $0x88] sm:$0xff]
    %v842 = vld [vmem:[%s823 + $0x90] sm:$0xff]
    %v843 = vld [vmem:[%s823 + $0x98] sm:$0xff]
    %v844 = vld [vmem:[%s823 + $0xa0] sm:$0xff]
    %v845 = vld [vmem:[%s823 + $0xa8] sm:$0xff]
    %v846 = vld [vmem:[%s823 + $0xb0] sm:$0xff]
    %v847 = vld [vmem:[%s823 + $0xb8] sm:$0xff]
    %v848 = vld [vmem:[%s823 + $0xc0] sm:$0xff]
    %v849 = vld [vmem:[%s823 + $0xc8] sm:$0xff]
    %v850 = vld [vmem:[%s823 + $0xd0] sm:$0xff]
    %v851 = vld [vmem:[%s823 + $0xd8] sm:$0xff]
    %v852 = vld [vmem:[%s823 + $0xe0] sm:$0xff]
    %v853 = vld [vmem:[%s823 + $0xe8] sm:$0xff]
    %v854 = vld [vmem:[%s823 + $0xf0] sm:$0xff]
    %v855 = vld [vmem:[%s823 + $0xf8] sm:$0xff]
    %v856 = vld [vmem:[%s823 + $0x100] sm:$0xff]
    %v857 = vld [vmem:[%s823 + $0x108] sm:$0xff]
    %v858 = vld [vmem:[%s823 + $0x110] sm:$0xff]
    %v859 = vld [vmem:[%s823 + $0x118] sm:$0xff]
    %v860 = vld [vmem:[%s823 + $0x120] sm:$0xff]
    %v861 = vld [vmem:[%s823 + $0x128] sm:$0xff]
    %v862 = vld [vmem:[%s823 + $0x130] sm:$0xff]
    %v863 = vld [vmem:[%s823 + $0x138] sm:$0xff]
    %v864 = vld [vmem:[%s823 + $0x140] sm:$0xff]
    %v865 = vld [vmem:[%s823 + $0x148] sm:$0xff]
    %v866 = vld [vmem:[%s823 + $0x150] sm:$0xff]
    %v867 = vld [vmem:[%s823 + $0x158] sm:$0xff]
    %v868 = vld [vmem:[%s823 + $0x160] sm:$0xff]
    %v869 = vld [vmem:[%s823 + $0x168] sm:$0xff]
    %v870 = vld [vmem:[%s823 + $0x170] sm:$0xff]
    %v871 = vld [vmem:[%s823 + $0x178] sm:$0xff]
    %v872 = vld [vmem:[%s823 + $0x180] sm:$0xff]
    %v873 = vld [vmem:[%s823 + $0x188] sm:$0xff]
    %v874 = vld [vmem:[%s823 + $0x190] sm:$0xff]
    %v875 = vld [vmem:[%s823 + $0x198] sm:$0xff]
    %v876 = vld [vmem:[%s823 + $0x1a0] sm:$0xff]
    %v877 = vld [vmem:[%s823 + $0x1a8] sm:$0xff]
    %v878 = vld [vmem:[%s823 + $0x1b0] sm:$0xff]
    %v879 = vld [vmem:[%s823 + $0x1b8] sm:$0xff]
    %v880 = vld [vmem:[%s823 + $0x1c0] sm:$0xff]
    %v881 = vld [vmem:[%s823 + $0x1c8] sm:$0xff]
    %v882 = vld [vmem:[%s823 + $0x1d0] sm:$0xff]
    %v883 = vld [vmem:[%s823 + $0x1d8] sm:$0xff]
    %v884 = vld [vmem:[%s823 + $0x1e0] sm:$0xff]
    %v885 = vld [vmem:[%s823 + $0x1e8] sm:$0xff]
    %v886 = vld [vmem:[%s823 + $0x1f0] sm:$0xff]
    %v887 = vld [vmem:[%s823 + $0x1f8] sm:$0xff]
    %v888 = vld [vmem:[%s823 + $0x200] sm:$0xff]
    %v889 = vld [vmem:[%s823 + $0x208] sm:$0xff]
    %v890 = vld [vmem:[%s823 + $0x210] sm:$0xff]
    %v891 = vld [vmem:[%s823 + $0x218] sm:$0xff]
    %v892 = vld [vmem:[%s823 + $0x220] sm:$0xff]
    %v893 = vld [vmem:[%s823 + $0x228] sm:$0xff]
    %v894 = vld [vmem:[%s823 + $0x230] sm:$0xff]
    %v895 = vld [vmem:[%s823 + $0x238] sm:$0xff]
    %v896 = vld [vmem:[%s823 + $0x240] sm:$0xff]
    %v897 = vld [vmem:[%s823 + $0x248] sm:$0xff]
    %v898 = vld [vmem:[%s823 + $0x250] sm:$0xff]
    %v899 = vld [vmem:[%s823 + $0x258] sm:$0xff]
    %v900 = vld [vmem:[%s823 + $0x260] sm:$0xff]
    %v901 = vld [vmem:[%s823 + $0x268] sm:$0xff]
    %v902 = vld [vmem:[%s823 + $0x270] sm:$0xff]
    %v903 = vld [vmem:[%s823 + $0x278] sm:$0xff]
    %v904 = vld [vmem:[%s823 + $0x280] sm:$0xff]
    %v905 = vld [vmem:[%s823 + $0x288] sm:$0xff]
    %v906 = vld [vmem:[%s823 + $0x290] sm:$0xff]
    %v907 = vld [vmem:[%s823 + $0x298] sm:$0xff]
    %v908 = vld [vmem:[%s823 + $0x2a0] sm:$0xff]
    %v909 = vld [vmem:[%s823 + $0x2a8] sm:$0xff]
    %v910 = vld [vmem:[%s823 + $0x2b0] sm:$0xff]
    %v911 = vld [vmem:[%s823 + $0x2b8] sm:$0xff]
    %v912 = vld [vmem:[%s823 + $0x2c0] sm:$0xff]
    %v913 = vld [vmem:[%s823 + $0x2c8] sm:$0xff]
    %v914 = vld [vmem:[%s823 + $0x2d0] sm:$0xff]
    %v915 = vld [vmem:[%s823 + $0x2d8] sm:$0xff]
    %v916 = vld [vmem:[%s823 + $0x2e0] sm:$0xff]
    %v917 = vld [vmem:[%s823 + $0x2e8] sm:$0xff]
    %v918 = vld [vmem:[%s823 + $0x2f0] sm:$0xff]
    %v919 = vld [vmem:[%s823 + $0x2f8] sm:$0xff]
    %v920 = vld [vmem:[%s823 + $0x300] sm:$0xff]
    %v921 = vld [vmem:[%s823 + $0x308] sm:$0xff]
    %v922 = vld [vmem:[%s823 + $0x310] sm:$0xff]
    %v923 = vld [vmem:[%s823 + $0x318] sm:$0xff]
    %v924 = vld [vmem:[%s823 + $0x320] sm:$0xff]
    %v925 = vld [vmem:[%s823 + $0x328] sm:$0xff]
    %v926 = vld [vmem:[%s823 + $0x330] sm:$0xff]
    %v927 = vld [vmem:[%s823 + $0x338] sm:$0xff]
    %v928 = vld [vmem:[%s823 + $0x340] sm:$0xff]
    %v929 = vld [vmem:[%s823 + $0x348] sm:$0xff]
    %v930 = vld [vmem:[%s823 + $0x350] sm:$0xff]
    %v931 = vld [vmem:[%s823 + $0x358] sm:$0xff]
    %v932 = vld [vmem:[%s823 + $0x360] sm:$0xff]
    %v933 = vld [vmem:[%s823 + $0x368] sm:$0xff]
    %v934 = vld [vmem:[%s823 + $0x370] sm:$0xff]
    %v935 = vld [vmem:[%s823 + $0x378] sm:$0xff]
    %v936 = vld [vmem:[%s823 + $0x380] sm:$0xff]
    %v937 = vld [vmem:[%s823 + $0x388] sm:$0xff]
    %v938 = vld [vmem:[%s823 + $0x390] sm:$0xff]
    %v939 = vld [vmem:[%s823 + $0x398] sm:$0xff]
    %v940 = vld [vmem:[%s823 + $0x3a0] sm:$0xff]
    %v941 = vld [vmem:[%s823 + $0x3a8] sm:$0xff]
    %v942 = vld [vmem:[%s823 + $0x3b0] sm:$0xff]
    %v943 = vld [vmem:[%s823 + $0x3b8] sm:$0xff]
    %v944 = vld [vmem:[%s823 + $0x3c0] sm:$0xff]
    %v945 = vld [vmem:[%s823 + $0x3c8] sm:$0xff]
    %v946 = vld [vmem:[%s823 + $0x3d0] sm:$0xff]
    %v947 = vld [vmem:[%s823 + $0x3d8] sm:$0xff]
    %v948 = vld [vmem:[%s823 + $0x3e0] sm:$0xff]
    %v949 = vld [vmem:[%s823 + $0x3e8] sm:$0xff]
    %v950 = vld [vmem:[%s823 + $0x3f0] sm:$0xff]
    %v951 = vld [vmem:[%s823 + $0x3f8] sm:$0xff]
    %s952 = scalar_lea.vmem [#allocation9], 8
    %v953 = vld [vmem:[%s952] sm:$0xf]
    %v955 = vperm.slane %v953, 0
    %v956 = vperm.slane %v953, 1
    %v957 = vperm.slane %v953, 2
    %v958 = vperm.slane %v953, 3
    %963 = vmatpush.msra.mxu0 %v884
    %964 = vmatpush.msra.mxu0 %v880
    %965 = vmatpush.msra.mxu0 %v876
    %966 = vmatpush.msra.mxu0 %v872
    %967 = vmatpush.msra.mxu0 %v868
    %968 = vmatpush.msra.mxu0 %v864
    %969 = vmatpush.msra.mxu0 %v860
    %970 = vmatpush.msra.mxu0 %v856
    %971 = vmatpush.msra.mxu0 %v852
    %972 = vmatpush.msra.mxu0 %v848
    %973 = vmatpush.msra.mxu0 %v844
    %974 = vmatpush.msra.mxu0 %v840
    %975 = vmatpush.msra.mxu0 %v836
    %976 = vmatpush.msra.mxu0 %v832
    %977 = vmatpush.msra.mxu0 %v828
    %978 = vmatpush.msra.mxu0 %v824
    %979 = vmatmul.f32.gmra.mxu0 %v819
    %v980 = vpop.f32.mrf.mxu0
    %v981 = vadd.f32 %v955, %v980
    %982 = vdwg.mxu0
    %983 = vmatpush.msra.mxu0 %v948
    %984 = vmatpush.msra.mxu0 %v944
    %985 = vmatpush.msra.mxu0 %v940
    %986 = vmatpush.msra.mxu0 %v936
    %987 = vmatpush.msra.mxu0 %v932
    %988 = vmatpush.msra.mxu0 %v928
    %989 = vmatpush.msra.mxu0 %v924
    %990 = vmatpush.msra.mxu0 %v920
    %991 = vmatpush.msra.mxu0 %v916
    %992 = vmatpush.msra.mxu0 %v912
    %993 = vmatpush.msra.mxu0 %v908
    %994 = vmatpush.msra.mxu0 %v904
    %995 = vmatpush.msra.mxu0 %v900
    %996 = vmatpush.msra.mxu0 %v896
    %997 = vmatpush.msra.mxu0 %v892
    %998 = vmatpush.msra.mxu0 %v888
    %999 = vmatmul.f32.gmra.mxu0 %v822
    %v1000 = vpop.f32.mrf.mxu0
    %v1001 = vadd.f32 %v981, %v1000
    %1002 = vdwg.mxu0
    %1003 = vmatpush.msra.mxu0 %v885
    %1004 = vmatpush.msra.mxu0 %v881
    %1005 = vmatpush.msra.mxu0 %v877
    %1006 = vmatpush.msra.mxu0 %v873
    %1007 = vmatpush.msra.mxu0 %v869
    %1008 = vmatpush.msra.mxu0 %v865
    %1009 = vmatpush.msra.mxu0 %v861
    %1010 = vmatpush.msra.mxu0 %v857
    %1011 = vmatpush.msra.mxu0 %v853
    %1012 = vmatpush.msra.mxu0 %v849
    %1013 = vmatpush.msra.mxu0 %v845
    %1014 = vmatpush.msra.mxu0 %v841
    %1015 = vmatpush.msra.mxu0 %v837
    %1016 = vmatpush.msra.mxu0 %v833
    %1017 = vmatpush.msra.mxu0 %v829
    %1018 = vmatpush.msra.mxu0 %v825
    %1019 = vmatmul.f32.gmra.mxu0 %v819
    %v1020 = vpop.f32.mrf.mxu0
    %v1021 = vadd.f32 %v956, %v1020
    %1022 = vdwg.mxu0
    %1023 = vmatpush.msra.mxu0 %v949
    %1024 = vmatpush.msra.mxu0 %v945
    %1025 = vmatpush.msra.mxu0 %v941
    %1026 = vmatpush.msra.mxu0 %v937
    %1027 = vmatpush.msra.mxu0 %v933
    %1028 = vmatpush.msra.mxu0 %v929
    %1029 = vmatpush.msra.mxu0 %v925
    %1030 = vmatpush.msra.mxu0 %v921
    %1031 = vmatpush.msra.mxu0 %v917
    %1032 = vmatpush.msra.mxu0 %v913
    %1033 = vmatpush.msra.mxu0 %v909
    %1034 = vmatpush.msra.mxu0 %v905
    %1035 = vmatpush.msra.mxu0 %v901
    %1036 = vmatpush.msra.mxu0 %v897
    %1037 = vmatpush.msra.mxu0 %v893
    %1038 = vmatpush.msra.mxu0 %v889
    %1039 = vmatmul.f32.gmra.mxu0 %v822
    %v1040 = vpop.f32.mrf.mxu0
    %v1041 = vadd.f32 %v1021, %v1040
    %1042 = vdwg.mxu0
    %1043 = vmatpush.msra.mxu0 %v886
    %1044 = vmatpush.msra.mxu0 %v882
    %1045 = vmatpush.msra.mxu0 %v878
    %1046 = vmatpush.msra.mxu0 %v874
    %1047 = vmatpush.msra.mxu0 %v870
    %1048 = vmatpush.msra.mxu0 %v866
    %1049 = vmatpush.msra.mxu0 %v862
    %1050 = vmatpush.msra.mxu0 %v858
    %1051 = vmatpush.msra.mxu0 %v854
    %1052 = vmatpush.msra.mxu0 %v850
    %1053 = vmatpush.msra.mxu0 %v846
    %1054 = vmatpush.msra.mxu0 %v842
    %1055 = vmatpush.msra.mxu0 %v838
    %1056 = vmatpush.msra.mxu0 %v834
    %1057 = vmatpush.msra.mxu0 %v830
    %1058 = vmatpush.msra.mxu0 %v826
    %1059 = vmatmul.f32.gmra.mxu0 %v819
    %v1060 = vpop.f32.mrf.mxu0
    %v1061 = vadd.f32 %v957, %v1060
    %1062 = vdwg.mxu0
    %1063 = vmatpush.msra.mxu0 %v950
    %1064 = vmatpush.msra.mxu0 %v946
    %1065 = vmatpush.msra.mxu0 %v942
    %1066 = vmatpush.msra.mxu0 %v938
    %1067 = vmatpush.msra.mxu0 %v934
    %1068 = vmatpush.msra.mxu0 %v930
    %1069 = vmatpush.msra.mxu0 %v926
    %1070 = vmatpush.msra.mxu0 %v922
    %1071 = vmatpush.msra.mxu0 %v918
    %1072 = vmatpush.msra.mxu0 %v914
    %1073 = vmatpush.msra.mxu0 %v910
    %1074 = vmatpush.msra.mxu0 %v906
    %1075 = vmatpush.msra.mxu0 %v902
    %1076 = vmatpush.msra.mxu0 %v898
    %1077 = vmatpush.msra.mxu0 %v894
    %1078 = vmatpush.msra.mxu0 %v890
    %1079 = vmatmul.f32.gmra.mxu0 %v822
    %v1080 = vpop.f32.mrf.mxu0
    %v1081 = vadd.f32 %v1061, %v1080
    %1082 = vdwg.mxu0
    %1083 = vmatpush.msra.mxu0 %v887
    %1084 = vmatpush.msra.mxu0 %v883
    %1085 = vmatpush.msra.mxu0 %v879
    %1086 = vmatpush.msra.mxu0 %v875
    %1087 = vmatpush.msra.mxu0 %v871
    %1088 = vmatpush.msra.mxu0 %v867
    %1089 = vmatpush.msra.mxu0 %v863
    %1090 = vmatpush.msra.mxu0 %v859
    %1091 = vmatpush.msra.mxu0 %v855
    %1092 = vmatpush.msra.mxu0 %v851
    %1093 = vmatpush.msra.mxu0 %v847
    %1094 = vmatpush.msra.mxu0 %v843
    %1095 = vmatpush.msra.mxu0 %v839
    %1096 = vmatpush.msra.mxu0 %v835
    %1097 = vmatpush.msra.mxu0 %v831
    %1098 = vmatpush.msra.mxu0 %v827
    %1099 = vmatmul.f32.gmra.mxu0 %v819
    %v1100 = vpop.f32.mrf.mxu0
    %v1101 = vadd.f32 %v958, %v1100
    %1102 = vdwg.mxu0
    %1103 = vmatpush.msra.mxu0 %v951
    %1104 = vmatpush.msra.mxu0 %v947
    %1105 = vmatpush.msra.mxu0 %v943
    %1106 = vmatpush.msra.mxu0 %v939
    %1107 = vmatpush.msra.mxu0 %v935
    %1108 = vmatpush.msra.mxu0 %v931
    %1109 = vmatpush.msra.mxu0 %v927
    %1110 = vmatpush.msra.mxu0 %v923
    %1111 = vmatpush.msra.mxu0 %v919
    %1112 = vmatpush.msra.mxu0 %v915
    %1113 = vmatpush.msra.mxu0 %v911
    %1114 = vmatpush.msra.mxu0 %v907
    %1115 = vmatpush.msra.mxu0 %v903
    %1116 = vmatpush.msra.mxu0 %v899
    %1117 = vmatpush.msra.mxu0 %v895
    %1118 = vmatpush.msra.mxu0 %v891
    %1119 = vmatmul.f32.gmra.mxu0 %v822
    %v1120 = vpop.f32.mrf.mxu0
    %v1121 = vadd.f32 %v1101, %v1120
    %1122 = vdwg.mxu0
    %v1123 = vxor.u32 %v1001, 2147483648
    %v1124 = vxor.u32 %v1041, 2147483648
    %v1125 = vmul.f32 %v1123, 1.442695
    %v1126 = vpow.pop %v1125
    %v1127 = vmul.f32 %v1124, 1.442695
    %v1128 = vpow.pop %v1127
    %v1129 = vadd.f32 %v1126, 1.0
    %v1130 = vadd.f32 %v1128, 1.0
    %v1131 = vrcp.pop %v1129
    %v1132 = vmul.f32 %v1129, %v1131
    %v1133 = vsub.f32 1.0, %v1132
    %v1134 = vmul.f32 %v1131, %v1133
    %v1135 = vadd.f32 %v1131, %v1134
    %vm1136 = vweird.f32 %v1129
    %vm1137 = vweird.f32 %v1131
    %vm1138 = vmor %vm1136, %vm1137
    %v1139 = vsel %vm1138, %v1131, %v1135
    %v1140 = vand.u32 2147483647, %v1129
    %vm1141 = vcmp.eq.f32.partialorder %v1140, 8.507059e+37
    %v1142 = vand.u32 %v1129, 2147483648
    %v1143 = vor.u32 1.1754944e-38, %v1142
    %v1144 = vsel %vm1141, %v1143, %v1139
    %v1145 = vmul.f32 1.0, %v1144
    %v1146 = vrcp.pop %v1130
    %v1147 = vmul.f32 %v1130, %v1146
    %v1148 = vsub.f32 1.0, %v1147
    %v1149 = vmul.f32 %v1146, %v1148
    %v1150 = vadd.f32 %v1146, %v1149
    %vm1151 = vweird.f32 %v1130
    %vm1152 = vweird.f32 %v1146
    %vm1153 = vmor %vm1151, %vm1152
    %v1154 = vsel %vm1153, %v1146, %v1150
    %v1155 = vand.u32 2147483647, %v1130
    %vm1156 = vcmp.eq.f32.partialorder %v1155, 8.507059e+37
    %v1157 = vand.u32 %v1130, 2147483648
    %v1158 = vor.u32 1.1754944e-38, %v1157
    %v1159 = vsel %vm1156, %v1158, %v1154
    %v1160 = vmul.f32 1.0, %v1159
    %v1161 = vmul.f32 %v1145, %v1121
    %v1162 = vadd.f32 %v1081, %v1161
    %v1163 = vtanh.pop %v1162
    %v1164 = vsub.f32 %v822, %v1163
    %v1165 = vmul.f32 %v1160, %v1164
    %v1166 = vadd.f32 %v1163, %v1165
    %1167 = vst [vmem:[%s821] sm:$0xff] %v1166
    %s1168 = scalar_lea.vmem [#allocation2], 24
    %v1169 = vld [vmem:[%s1168] sm:$0xff]
    %s1170 = scalar_lea.vmem [#allocation8], 3072
    %v1171 = vld [vmem:[%s1170] sm:$0xff]
    %v1172 = vld [vmem:[%s1170 + $0x8] sm:$0xff]
    %v1173 = vld [vmem:[%s1170 + $0x10] sm:$0xff]
    %v1174 = vld [vmem:[%s1170 + $0x18] sm:$0xff]
    %v1175 = vld [vmem:[%s1170 + $0x20] sm:$0xff]
    %v1176 = vld [vmem:[%s1170 + $0x28] sm:$0xff]
    %v1177 = vld [vmem:[%s1170 + $0x30] sm:$0xff]
    %v1178 = vld [vmem:[%s1170 + $0x38] sm:$0xff]
    %v1179 = vld [vmem:[%s1170 + $0x40] sm:$0xff]
    %v1180 = vld [vmem:[%s1170 + $0x48] sm:$0xff]
    %v1181 = vld [vmem:[%s1170 + $0x50] sm:$0xff]
    %v1182 = vld [vmem:[%s1170 + $0x58] sm:$0xff]
    %v1183 = vld [vmem:[%s1170 + $0x60] sm:$0xff]
    %v1184 = vld [vmem:[%s1170 + $0x68] sm:$0xff]
    %v1185 = vld [vmem:[%s1170 + $0x70] sm:$0xff]
    %v1186 = vld [vmem:[%s1170 + $0x78] sm:$0xff]
    %v1187 = vld [vmem:[%s1170 + $0x80] sm:$0xff]
    %v1188 = vld [vmem:[%s1170 + $0x88] sm:$0xff]
    %v1189 = vld [vmem:[%s1170 + $0x90] sm:$0xff]
    %v1190 = vld [vmem:[%s1170 + $0x98] sm:$0xff]
    %v1191 = vld [vmem:[%s1170 + $0xa0] sm:$0xff]
    %v1192 = vld [vmem:[%s1170 + $0xa8] sm:$0xff]
    %v1193 = vld [vmem:[%s1170 + $0xb0] sm:$0xff]
    %v1194 = vld [vmem:[%s1170 + $0xb8] sm:$0xff]
    %v1195 = vld [vmem:[%s1170 + $0xc0] sm:$0xff]
    %v1196 = vld [vmem:[%s1170 + $0xc8] sm:$0xff]
    %v1197 = vld [vmem:[%s1170 + $0xd0] sm:$0xff]
    %v1198 = vld [vmem:[%s1170 + $0xd8] sm:$0xff]
    %v1199 = vld [vmem:[%s1170 + $0xe0] sm:$0xff]
    %v1200 = vld [vmem:[%s1170 + $0xe8] sm:$0xff]
    %v1201 = vld [vmem:[%s1170 + $0xf0] sm:$0xff]
    %v1202 = vld [vmem:[%s1170 + $0xf8] sm:$0xff]
    %v1203 = vld [vmem:[%s1170 + $0x100] sm:$0xff]
    %v1204 = vld [vmem:[%s1170 + $0x108] sm:$0xff]
    %v1205 = vld [vmem:[%s1170 + $0x110] sm:$0xff]
    %v1206 = vld [vmem:[%s1170 + $0x118] sm:$0xff]
    %v1207 = vld [vmem:[%s1170 + $0x120] sm:$0xff]
    %v1208 = vld [vmem:[%s1170 + $0x128] sm:$0xff]
    %v1209 = vld [vmem:[%s1170 + $0x130] sm:$0xff]
    %v1210 = vld [vmem:[%s1170 + $0x138] sm:$0xff]
    %v1211 = vld [vmem:[%s1170 + $0x140] sm:$0xff]
    %v1212 = vld [vmem:[%s1170 + $0x148] sm:$0xff]
    %v1213 = vld [vmem:[%s1170 + $0x150] sm:$0xff]
    %v1214 = vld [vmem:[%s1170 + $0x158] sm:$0xff]
    %v1215 = vld [vmem:[%s1170 + $0x160] sm:$0xff]
    %v1216 = vld [vmem:[%s1170 + $0x168] sm:$0xff]
    %v1217 = vld [vmem:[%s1170 + $0x170] sm:$0xff]
    %v1218 = vld [vmem:[%s1170 + $0x178] sm:$0xff]
    %v1219 = vld [vmem:[%s1170 + $0x180] sm:$0xff]
    %v1220 = vld [vmem:[%s1170 + $0x188] sm:$0xff]
    %v1221 = vld [vmem:[%s1170 + $0x190] sm:$0xff]
    %v1222 = vld [vmem:[%s1170 + $0x198] sm:$0xff]
    %v1223 = vld [vmem:[%s1170 + $0x1a0] sm:$0xff]
    %v1224 = vld [vmem:[%s1170 + $0x1a8] sm:$0xff]
    %v1225 = vld [vmem:[%s1170 + $0x1b0] sm:$0xff]
    %v1226 = vld [vmem:[%s1170 + $0x1b8] sm:$0xff]
    %v1227 = vld [vmem:[%s1170 + $0x1c0] sm:$0xff]
    %v1228 = vld [vmem:[%s1170 + $0x1c8] sm:$0xff]
    %v1229 = vld [vmem:[%s1170 + $0x1d0] sm:$0xff]
    %v1230 = vld [vmem:[%s1170 + $0x1d8] sm:$0xff]
    %v1231 = vld [vmem:[%s1170 + $0x1e0] sm:$0xff]
    %v1232 = vld [vmem:[%s1170 + $0x1e8] sm:$0xff]
    %v1233 = vld [vmem:[%s1170 + $0x1f0] sm:$0xff]
    %v1234 = vld [vmem:[%s1170 + $0x1f8] sm:$0xff]
    %v1235 = vld [vmem:[%s1170 + $0x200] sm:$0xff]
    %v1236 = vld [vmem:[%s1170 + $0x208] sm:$0xff]
    %v1237 = vld [vmem:[%s1170 + $0x210] sm:$0xff]
    %v1238 = vld [vmem:[%s1170 + $0x218] sm:$0xff]
    %v1239 = vld [vmem:[%s1170 + $0x220] sm:$0xff]
    %v1240 = vld [vmem:[%s1170 + $0x228] sm:$0xff]
    %v1241 = vld [vmem:[%s1170 + $0x230] sm:$0xff]
    %v1242 = vld [vmem:[%s1170 + $0x238] sm:$0xff]
    %v1243 = vld [vmem:[%s1170 + $0x240] sm:$0xff]
    %v1244 = vld [vmem:[%s1170 + $0x248] sm:$0xff]
    %v1245 = vld [vmem:[%s1170 + $0x250] sm:$0xff]
    %v1246 = vld [vmem:[%s1170 + $0x258] sm:$0xff]
    %v1247 = vld [vmem:[%s1170 + $0x260] sm:$0xff]
    %v1248 = vld [vmem:[%s1170 + $0x268] sm:$0xff]
    %v1249 = vld [vmem:[%s1170 + $0x270] sm:$0xff]
    %v1250 = vld [vmem:[%s1170 + $0x278] sm:$0xff]
    %v1251 = vld [vmem:[%s1170 + $0x280] sm:$0xff]
    %v1252 = vld [vmem:[%s1170 + $0x288] sm:$0xff]
    %v1253 = vld [vmem:[%s1170 + $0x290] sm:$0xff]
    %v1254 = vld [vmem:[%s1170 + $0x298] sm:$0xff]
    %v1255 = vld [vmem:[%s1170 + $0x2a0] sm:$0xff]
    %v1256 = vld [vmem:[%s1170 + $0x2a8] sm:$0xff]
    %v1257 = vld [vmem:[%s1170 + $0x2b0] sm:$0xff]
    %v1258 = vld [vmem:[%s1170 + $0x2b8] sm:$0xff]
    %v1259 = vld [vmem:[%s1170 + $0x2c0] sm:$0xff]
    %v1260 = vld [vmem:[%s1170 + $0x2c8] sm:$0xff]
    %v1261 = vld [vmem:[%s1170 + $0x2d0] sm:$0xff]
    %v1262 = vld [vmem:[%s1170 + $0x2d8] sm:$0xff]
    %v1263 = vld [vmem:[%s1170 + $0x2e0] sm:$0xff]
    %v1264 = vld [vmem:[%s1170 + $0x2e8] sm:$0xff]
    %v1265 = vld [vmem:[%s1170 + $0x2f0] sm:$0xff]
    %v1266 = vld [vmem:[%s1170 + $0x2f8] sm:$0xff]
    %v1267 = vld [vmem:[%s1170 + $0x300] sm:$0xff]
    %v1268 = vld [vmem:[%s1170 + $0x308] sm:$0xff]
    %v1269 = vld [vmem:[%s1170 + $0x310] sm:$0xff]
    %v1270 = vld [vmem:[%s1170 + $0x318] sm:$0xff]
    %v1271 = vld [vmem:[%s1170 + $0x320] sm:$0xff]
    %v1272 = vld [vmem:[%s1170 + $0x328] sm:$0xff]
    %v1273 = vld [vmem:[%s1170 + $0x330] sm:$0xff]
    %v1274 = vld [vmem:[%s1170 + $0x338] sm:$0xff]
    %v1275 = vld [vmem:[%s1170 + $0x340] sm:$0xff]
    %v1276 = vld [vmem:[%s1170 + $0x348] sm:$0xff]
    %v1277 = vld [vmem:[%s1170 + $0x350] sm:$0xff]
    %v1278 = vld [vmem:[%s1170 + $0x358] sm:$0xff]
    %v1279 = vld [vmem:[%s1170 + $0x360] sm:$0xff]
    %v1280 = vld [vmem:[%s1170 + $0x368] sm:$0xff]
    %v1281 = vld [vmem:[%s1170 + $0x370] sm:$0xff]
    %v1282 = vld [vmem:[%s1170 + $0x378] sm:$0xff]
    %v1283 = vld [vmem:[%s1170 + $0x380] sm:$0xff]
    %v1284 = vld [vmem:[%s1170 + $0x388] sm:$0xff]
    %v1285 = vld [vmem:[%s1170 + $0x390] sm:$0xff]
    %v1286 = vld [vmem:[%s1170 + $0x398] sm:$0xff]
    %v1287 = vld [vmem:[%s1170 + $0x3a0] sm:$0xff]
    %v1288 = vld [vmem:[%s1170 + $0x3a8] sm:$0xff]
    %v1289 = vld [vmem:[%s1170 + $0x3b0] sm:$0xff]
    %v1290 = vld [vmem:[%s1170 + $0x3b8] sm:$0xff]
    %v1291 = vld [vmem:[%s1170 + $0x3c0] sm:$0xff]
    %v1292 = vld [vmem:[%s1170 + $0x3c8] sm:$0xff]
    %v1293 = vld [vmem:[%s1170 + $0x3d0] sm:$0xff]
    %v1294 = vld [vmem:[%s1170 + $0x3d8] sm:$0xff]
    %v1295 = vld [vmem:[%s1170 + $0x3e0] sm:$0xff]
    %v1296 = vld [vmem:[%s1170 + $0x3e8] sm:$0xff]
    %v1297 = vld [vmem:[%s1170 + $0x3f0] sm:$0xff]
    %v1298 = vld [vmem:[%s1170 + $0x3f8] sm:$0xff]
    %s1299 = scalar_lea.vmem [#allocation9], 12
    %v1300 = vld [vmem:[%s1299] sm:$0xf]
    %v1302 = vperm.slane %v1300, 0
    %v1303 = vperm.slane %v1300, 1
    %v1304 = vperm.slane %v1300, 2
    %v1305 = vperm.slane %v1300, 3
    %1310 = vmatpush.msra.mxu0 %v1231
    %1311 = vmatpush.msra.mxu0 %v1227
    %1312 = vmatpush.msra.mxu0 %v1223
    %1313 = vmatpush.msra.mxu0 %v1219
    %1314 = vmatpush.msra.mxu0 %v1215
    %1315 = vmatpush.msra.mxu0 %v1211
    %1316 = vmatpush.msra.mxu0 %v1207
    %1317 = vmatpush.msra.mxu0 %v1203
    %1318 = vmatpush.msra.mxu0 %v1199
    %1319 = vmatpush.msra.mxu0 %v1195
    %1320 = vmatpush.msra.mxu0 %v1191
    %1321 = vmatpush.msra.mxu0 %v1187
    %1322 = vmatpush.msra.mxu0 %v1183
    %1323 = vmatpush.msra.mxu0 %v1179
    %1324 = vmatpush.msra.mxu0 %v1175
    %1325 = vmatpush.msra.mxu0 %v1171
    %1326 = vmatmul.f32.gmra.mxu0 %v1166
    %v1327 = vpop.f32.mrf.mxu0
    %v1328 = vadd.f32 %v1302, %v1327
    %1329 = vdwg.mxu0
    %1330 = vmatpush.msra.mxu0 %v1295
    %1331 = vmatpush.msra.mxu0 %v1291
    %1332 = vmatpush.msra.mxu0 %v1287
    %1333 = vmatpush.msra.mxu0 %v1283
    %1334 = vmatpush.msra.mxu0 %v1279
    %1335 = vmatpush.msra.mxu0 %v1275
    %1336 = vmatpush.msra.mxu0 %v1271
    %1337 = vmatpush.msra.mxu0 %v1267
    %1338 = vmatpush.msra.mxu0 %v1263
    %1339 = vmatpush.msra.mxu0 %v1259
    %1340 = vmatpush.msra.mxu0 %v1255
    %1341 = vmatpush.msra.mxu0 %v1251
    %1342 = vmatpush.msra.mxu0 %v1247
    %1343 = vmatpush.msra.mxu0 %v1243
    %1344 = vmatpush.msra.mxu0 %v1239
    %1345 = vmatpush.msra.mxu0 %v1235
    %1346 = vmatmul.f32.gmra.mxu0 %v1169
    %v1347 = vpop.f32.mrf.mxu0
    %v1348 = vadd.f32 %v1328, %v1347
    %1349 = vdwg.mxu0
    %1350 = vmatpush.msra.mxu0 %v1232
    %1351 = vmatpush.msra.mxu0 %v1228
    %1352 = vmatpush.msra.mxu0 %v1224
    %1353 = vmatpush.msra.mxu0 %v1220
    %1354 = vmatpush.msra.mxu0 %v1216
    %1355 = vmatpush.msra.mxu0 %v1212
    %1356 = vmatpush.msra.mxu0 %v1208
    %1357 = vmatpush.msra.mxu0 %v1204
    %1358 = vmatpush.msra.mxu0 %v1200
    %1359 = vmatpush.msra.mxu0 %v1196
    %1360 = vmatpush.msra.mxu0 %v1192
    %1361 = vmatpush.msra.mxu0 %v1188
    %1362 = vmatpush.msra.mxu0 %v1184
    %1363 = vmatpush.msra.mxu0 %v1180
    %1364 = vmatpush.msra.mxu0 %v1176
    %1365 = vmatpush.msra.mxu0 %v1172
    %1366 = vmatmul.f32.gmra.mxu0 %v1166
    %v1367 = vpop.f32.mrf.mxu0
    %v1368 = vadd.f32 %v1303, %v1367
    %1369 = vdwg.mxu0
    %1370 = vmatpush.msra.mxu0 %v1296
    %1371 = vmatpush.msra.mxu0 %v1292
    %1372 = vmatpush.msra.mxu0 %v1288
    %1373 = vmatpush.msra.mxu0 %v1284
    %1374 = vmatpush.msra.mxu0 %v1280
    %1375 = vmatpush.msra.mxu0 %v1276
    %1376 = vmatpush.msra.mxu0 %v1272
    %1377 = vmatpush.msra.mxu0 %v1268
    %1378 = vmatpush.msra.mxu0 %v1264
    %1379 = vmatpush.msra.mxu0 %v1260
    %1380 = vmatpush.msra.mxu0 %v1256
    %1381 = vmatpush.msra.mxu0 %v1252
    %1382 = vmatpush.msra.mxu0 %v1248
    %1383 = vmatpush.msra.mxu0 %v1244
    %1384 = vmatpush.msra.mxu0 %v1240
    %1385 = vmatpush.msra.mxu0 %v1236
    %1386 = vmatmul.f32.gmra.mxu0 %v1169
    %v1387 = vpop.f32.mrf.mxu0
    %v1388 = vadd.f32 %v1368, %v1387
    %1389 = vdwg.mxu0
    %1390 = vmatpush.msra.mxu0 %v1233
    %1391 = vmatpush.msra.mxu0 %v1229
    %1392 = vmatpush.msra.mxu0 %v1225
    %1393 = vmatpush.msra.mxu0 %v1221
    %1394 = vmatpush.msra.mxu0 %v1217
    %1395 = vmatpush.msra.mxu0 %v1213
    %1396 = vmatpush.msra.mxu0 %v1209
    %1397 = vmatpush.msra.mxu0 %v1205
    %1398 = vmatpush.msra.mxu0 %v1201
    %1399 = vmatpush.msra.mxu0 %v1197
    %1400 = vmatpush.msra.mxu0 %v1193
    %1401 = vmatpush.msra.mxu0 %v1189
    %1402 = vmatpush.msra.mxu0 %v1185
    %1403 = vmatpush.msra.mxu0 %v1181
    %1404 = vmatpush.msra.mxu0 %v1177
    %1405 = vmatpush.msra.mxu0 %v1173
    %1406 = vmatmul.f32.gmra.mxu0 %v1166
    %v1407 = vpop.f32.mrf.mxu0
    %v1408 = vadd.f32 %v1304, %v1407
    %1409 = vdwg.mxu0
    %1410 = vmatpush.msra.mxu0 %v1297
    %1411 = vmatpush.msra.mxu0 %v1293
    %1412 = vmatpush.msra.mxu0 %v1289
    %1413 = vmatpush.msra.mxu0 %v1285
    %1414 = vmatpush.msra.mxu0 %v1281
    %1415 = vmatpush.msra.mxu0 %v1277
    %1416 = vmatpush.msra.mxu0 %v1273
    %1417 = vmatpush.msra.mxu0 %v1269
    %1418 = vmatpush.msra.mxu0 %v1265
    %1419 = vmatpush.msra.mxu0 %v1261
    %1420 = vmatpush.msra.mxu0 %v1257
    %1421 = vmatpush.msra.mxu0 %v1253
    %1422 = vmatpush.msra.mxu0 %v1249
    %1423 = vmatpush.msra.mxu0 %v1245
    %1424 = vmatpush.msra.mxu0 %v1241
    %1425 = vmatpush.msra.mxu0 %v1237
    %1426 = vmatmul.f32.gmra.mxu0 %v1169
    %v1427 = vpop.f32.mrf.mxu0
    %v1428 = vadd.f32 %v1408, %v1427
    %1429 = vdwg.mxu0
    %1430 = vmatpush.msra.mxu0 %v1234
    %1431 = vmatpush.msra.mxu0 %v1230
    %1432 = vmatpush.msra.mxu0 %v1226
    %1433 = vmatpush.msra.mxu0 %v1222
    %1434 = vmatpush.msra.mxu0 %v1218
    %1435 = vmatpush.msra.mxu0 %v1214
    %1436 = vmatpush.msra.mxu0 %v1210
    %1437 = vmatpush.msra.mxu0 %v1206
    %1438 = vmatpush.msra.mxu0 %v1202
    %1439 = vmatpush.msra.mxu0 %v1198
    %1440 = vmatpush.msra.mxu0 %v1194
    %1441 = vmatpush.msra.mxu0 %v1190
    %1442 = vmatpush.msra.mxu0 %v1186
    %1443 = vmatpush.msra.mxu0 %v1182
    %1444 = vmatpush.msra.mxu0 %v1178
    %1445 = vmatpush.msra.mxu0 %v1174
    %1446 = vmatmul.f32.gmra.mxu0 %v1166
    %v1447 = vpop.f32.mrf.mxu0
    %v1448 = vadd.f32 %v1305, %v1447
    %1449 = vdwg.mxu0
    %1450 = vmatpush.msra.mxu0 %v1298
    %1451 = vmatpush.msra.mxu0 %v1294
    %1452 = vmatpush.msra.mxu0 %v1290
    %1453 = vmatpush.msra.mxu0 %v1286
    %1454 = vmatpush.msra.mxu0 %v1282
    %1455 = vmatpush.msra.mxu0 %v1278
    %1456 = vmatpush.msra.mxu0 %v1274
    %1457 = vmatpush.msra.mxu0 %v1270
    %1458 = vmatpush.msra.mxu0 %v1266
    %1459 = vmatpush.msra.mxu0 %v1262
    %1460 = vmatpush.msra.mxu0 %v1258
    %1461 = vmatpush.msra.mxu0 %v1254
    %1462 = vmatpush.msra.mxu0 %v1250
    %1463 = vmatpush.msra.mxu0 %v1246
    %1464 = vmatpush.msra.mxu0 %v1242
    %1465 = vmatpush.msra.mxu0 %v1238
    %1466 = vmatmul.f32.gmra.mxu0 %v1169
    %v1467 = vpop.f32.mrf.mxu0
    %v1468 = vadd.f32 %v1448, %v1467
    %1469 = vdwg.mxu0
    %v1470 = vxor.u32 %v1348, 2147483648
    %v1471 = vxor.u32 %v1388, 2147483648
    %v1472 = vmul.f32 %v1470, 1.442695
    %v1473 = vpow.pop %v1472
    %v1474 = vmul.f32 %v1471, 1.442695
    %v1475 = vpow.pop %v1474
    %v1476 = vadd.f32 %v1473, 1.0
    %v1477 = vadd.f32 %v1475, 1.0
    %v1478 = vrcp.pop %v1476
    %v1479 = vmul.f32 %v1476, %v1478
    %v1480 = vsub.f32 1.0, %v1479
    %v1481 = vmul.f32 %v1478, %v1480
    %v1482 = vadd.f32 %v1478, %v1481
    %vm1483 = vweird.f32 %v1476
    %vm1484 = vweird.f32 %v1478
    %vm1485 = vmor %vm1483, %vm1484
    %v1486 = vsel %vm1485, %v1478, %v1482
    %v1487 = vand.u32 2147483647, %v1476
    %vm1488 = vcmp.eq.f32.partialorder %v1487, 8.507059e+37
    %v1489 = vand.u32 %v1476, 2147483648
    %v1490 = vor.u32 1.1754944e-38, %v1489
    %v1491 = vsel %vm1488, %v1490, %v1486
    %v1492 = vmul.f32 1.0, %v1491
    %v1493 = vrcp.pop %v1477
    %v1494 = vmul.f32 %v1477, %v1493
    %v1495 = vsub.f32 1.0, %v1494
    %v1496 = vmul.f32 %v1493, %v1495
    %v1497 = vadd.f32 %v1493, %v1496
    %vm1498 = vweird.f32 %v1477
    %vm1499 = vweird.f32 %v1493
    %vm1500 = vmor %vm1498, %vm1499
    %v1501 = vsel %vm1500, %v1493, %v1497
    %v1502 = vand.u32 2147483647, %v1477
    %vm1503 = vcmp.eq.f32.partialorder %v1502, 8.507059e+37
    %v1504 = vand.u32 %v1477, 2147483648
    %v1505 = vor.u32 1.1754944e-38, %v1504
    %v1506 = vsel %vm1503, %v1505, %v1501
    %v1507 = vmul.f32 1.0, %v1506
    %v1508 = vmul.f32 %v1492, %v1468
    %v1509 = vadd.f32 %v1428, %v1508
    %v1510 = vtanh.pop %v1509
    %v1511 = vsub.f32 %v1169, %v1510
    %v1512 = vmul.f32 %v1507, %v1511
    %v1513 = vadd.f32 %v1510, %v1512
    %1514 = vst [vmem:[%s1168] sm:$0xff] %v1513
    %v1515 = vld [vmem:[#allocation11] sm:$0xff]
    %v1516 = vld [vmem:[#allocation11 + $0x8] sm:$0xff]
    %v1517 = vld [vmem:[#allocation11 + $0x10] sm:$0xff]
    %v1518 = vld [vmem:[#allocation11 + $0x18] sm:$0xff]
    %v1519 = vld [vmem:[#allocation11 + $0x20] sm:$0xff]
    %v1520 = vld [vmem:[#allocation11 + $0x28] sm:$0xff]
    %v1521 = vld [vmem:[#allocation11 + $0x30] sm:$0xff]
    %v1522 = vld [vmem:[#allocation11 + $0x38] sm:$0xff]
    %v1523 = vld [vmem:[#allocation11 + $0x40] sm:$0xff]
    %v1524 = vld [vmem:[#allocation11 + $0x48] sm:$0xff]
    %v1525 = vld [vmem:[#allocation11 + $0x50] sm:$0xff]
    %v1526 = vld [vmem:[#allocation11 + $0x58] sm:$0xff]
    %v1527 = vld [vmem:[#allocation11 + $0x60] sm:$0xff]
    %v1528 = vld [vmem:[#allocation11 + $0x68] sm:$0xff]
    %v1529 = vld [vmem:[#allocation11 + $0x70] sm:$0xff]
    %v1530 = vld [vmem:[#allocation11 + $0x78] sm:$0xff]
    %v1531 = vld [vmem:[#allocation12] sm:$0x1]
    %v1533 = vperm.slane %v1531, 0
    %1535 = vmatpush.msra.mxu0 %v1530
    %1536 = vmatpush.msra.mxu0 %v1529
    %1537 = vmatpush.msra.mxu0 %v1528
    %1538 = vmatpush.msra.mxu0 %v1527
    %1539 = vmatpush.msra.mxu0 %v1526
    %1540 = vmatpush.msra.mxu0 %v1525
    %1541 = vmatpush.msra.mxu0 %v1524
    %1542 = vmatpush.msra.mxu0 %v1523
    %1543 = vmatpush.msra.mxu0 %v1522
    %1544 = vmatpush.msra.mxu0 %v1521
    %1545 = vmatpush.msra.mxu0 %v1520
    %1546 = vmatpush.msra.mxu0 %v1519
    %1547 = vmatpush.msra.mxu0 %v1518
    %1548 = vmatpush.msra.mxu0 %v1517
    %1549 = vmatpush.msra.mxu0 %v1516
    %1550 = vmatpush.msra.mxu0 %v1515
    %1551 = vmatmul.f32.gmra.mxu0 %v1513
    %v1552 = vpop.f32.mrf.mxu0
    %v1553 = vadd.f32 %v1533, %v1552
    %1554 = vdwg.mxu0
    %1555 = vmax.xlane.f32.xlu0 %v1553
    %v1556 = vpop.xlane.xlu0 %1555
    %v1557 = vsub.f32 %v1553, %v1556
    %v1558 = vmul.f32 %v1557, 1.442695
    %v1559 = vpow.pop %v1558
    %1560 = vadd.xlane.f32.xlu0 %v1559
    %v1561 = vpop.xlane.xlu0 %1560
    %v1562 = vlog2.pop %v1561
    %v1563 = vmul.f32 %v1562, 0.6931472
    %v1564 = vadd.f32 %v1556, %v1563
    %v1565 = vsub.f32 %v1553, %v1564
    %1566 = vst [vmem:[#allocation14] sm:$0xff] %v1565
    %v1567 = vld [vmem:[#allocation2] sm:$0xff]
    %v1568 = vld [vmem:[#allocation2 + $0x8] sm:$0xff]
    %v1569 = vld [vmem:[#allocation2 + $0x10] sm:$0xff]
    %v1570 = vld [vmem:[#allocation2 + $0x18] sm:$0xff]
    %1571 = vst [vmem:[#allocation15] sm:$0xff] %v1567
    %1572 = vst [vmem:[#allocation15 + $0x8] sm:$0xff] %v1568
    %1573 = vst [vmem:[#allocation15 + $0x10] sm:$0xff] %v1569
    %1574 = vst [vmem:[#allocation15 + $0x18] sm:$0xff] %v1570
    // Predicated region
    $region54: #{_rnn_seq_padded.1} parent=1 // pred_check
      _
    $region55: #{_rnn_seq_padded.1} parent=1 // pred_check_branch
      %1576 = sbr.rel (0) target = $region57
    $region56: #{_rnn_seq_padded.1} parent=1 // pred_region
      %1578 = vsyncadd [#allocation5], 0
      %s1580 = sshll.u32 [#allocation14], 4
      %s1581 = int_to_ptr.vmem [resolvable:$true] %s1580
      %s1582 = sshll.u32 %s6, 4
      %s1583 = int_to_ptr.hbm [resolvable:$true] %s1582
      %1585 = dma.vmem_to_hbm [thread:$0]  %s1581, 128, %s1583, [#allocation5]
    $region57: #{_rnn_seq_padded.1} parent=1 // pred_fallthru
      _
    // Predicated region
    $region58: #{_rnn_seq_padded.1} parent=1 // pred_check
      _
    $region59: #{_rnn_seq_padded.1} parent=1 // pred_check_branch
      %1587 = sbr.rel (0) target = $region61
    $region60: #{_rnn_seq_padded.1} parent=1 // pred_region
      %1589 = vsyncadd [#allocation16], 0
      %s1590 = sshll.u32 [#allocation15], 4
      %s1591 = int_to_ptr.vmem [resolvable:$true] %s1590
      %s1592 = sshll.u32 %s7, 4
      %s1593 = int_to_ptr.hbm [resolvable:$true] %s1592
      %1598 = dma.vmem_to_hbm [thread:$0]  %s1591, 512, %s1593, [#allocation16], 128, 128, 8
    $region61: #{_rnn_seq_padded.1} parent=1 // pred_fallthru
      _
    // Predicated region
    $region62: #{_rnn_seq_padded.1} parent=1 // pred_check
      _
    $region63: #{_rnn_seq_padded.1} parent=1 // pred_check_branch
      %1600 = sbr.rel (0) target = $region65
    $region64: #{_rnn_seq_padded.1} parent=1 // pred_region
      %1602 = dma.done [#allocation5], 128
    $region65: #{_rnn_seq_padded.1} parent=1 // pred_fallthru
      _
    // Predicated region
    $region66: #{_rnn_seq_padded.1} parent=1 // pred_check
      _
    $region67: #{_rnn_seq_padded.1} parent=1 // pred_check_branch
      %1604 = sbr.rel (0) target = $region69
    $region68: #{_rnn_seq_padded.1} parent=1 // pred_region
      %1606 = dma.done [#allocation16], 512
    $region69: #{_rnn_seq_padded.1} parent=1 // pred_fallthru
      _
    %1607 = vsyncpa [#allocation4], 1
    %1608 = vsyncpa [#allocation7], 1
    %1609 = vsyncpa [#allocation10], 1
    %1610 = vsyncpa [#allocation13], 1
    %1611 = vsyncpa [#allocation5], 1
    %1612 = vsyncpa [#allocation16], 1

</llo_original>
